<compile_context>
chip_gen: v7x
topology: tpu7x:2x2x1
jax: 0.10.0
libtpu: 0.0.40
codegen_flags: <defaults>
</compile_context>

<pallas_src>
import functools

import jax
import jax.numpy as jnp
from jax.experimental import pallas as pl
from jax.experimental.pallas import tpu as pltpu

# ----------------------------- config (scaled-down CLIP text) -------------------
HIDDEN = 128          # config.hidden_size             (real: 768)
HEADS = 4             # config.num_attention_heads     (real: 12)
HEAD_DIM = HIDDEN // HEADS
INTERMEDIATE = 256    # config.intermediate_size       (real: 3072)
LAYERS = 2            # config.num_hidden_layers       (real: 12)
VOCAB = 1000          # config.vocab_size              (real: 49408)
MAX_POS = 16          # config.max_position_embeddings (real: 77)
LN_EPS = 1e-5         # config.layer_norm_eps

# Matmul weight/operand dtype.  bf16 halves weight DMA bytes and is MXU-native on
# v5e/v6e/v7x; accumulation stays f32.  Use jnp.float32 for exact PyTorch parity.
MXU_DTYPE = jnp.bfloat16


# ----------------------------- fused Pallas kernel -------------------------------
def clip_encoder_stack_kernel(
    x_hbm_ref,                              # (N, D) input hidden states, raw HBM ref
    ln1_g_ref, ln1_b_ref,                   # (1, 1, D) f32 (current layer)
    wqkv_ref, bqkv_ref,                     # (1, D, 3D) MXU_DTYPE / (1, 1, 3D) f32
    wo_ref, bo_ref,                         # (1, D, D) MXU_DTYPE / (1, 1, D) f32
    ln2_g_ref, ln2_b_ref,                   # (1, 1, D) f32
    w1_ref, b1_ref, w2_ref, b2_ref,         # (1, D, I) / (1, 1, I) / (1, I, D) / (1, 1, D)
    fin_g_ref, fin_b_ref,                   # (1, D) final LayerNorm params (f32)
    o_ref,                                  # (N, D) f32 output block; resident residual stream
    mask_ref,                               # VMEM scratch (L, L) f32: causal additive bias
    dma_sem,                                # DMA semaphore for the layer-0 input copy
    *, batch, seq, num_heads, head_dim,
):
    layer = pl.program_id(0)
    n_layers = pl.num_programs(0)
    D = num_heads * head_dim

    # ---- one-time init (layer 0): DMA the input slab into the resident output
    # block and build the causal bias (overlapped with the DMA). -----------------
    @pl.when(layer == 0)
    def _():
        cp = pltpu.make_async_copy(x_hbm_ref, o_ref, dma_sem.at[0])
        cp.start()
        r = jax.lax.broadcasted_iota(jnp.int32, (seq, seq), 0)
        c = jax.lax.broadcasted_iota(jnp.int32, (seq, seq), 1)
        mask_ref[...] = jnp.where(c <= r, 0.0, -1e9).astype(jnp.float32)
        cp.wait()

    x = o_ref[...]                                               # (N, D) f32 residual stream

    def layer_norm(t, gamma, beta):
        mu = jnp.mean(t, axis=-1, keepdims=True)
        var = jnp.mean((t - mu) ** 2, axis=-1, keepdims=True)    # biased var, matches torch
        return (t - mu) * jax.lax.rsqrt(var + LN_EPS) * gamma + beta

    # ---------------- LayerNorm 1 + multi-head causal self-attention ------------
    h = layer_norm(x, ln1_g_ref[0], ln1_b_ref[0])

    # Fused QKV projection: one (N, D) @ (D, 3D) MXU issue; 1/sqrt(head_dim) already
    # folded into the q slice of Wqkv / bqkv on the host.
    qkv = jnp.dot(h.astype(MXU_DTYPE), wqkv_ref[0],
                  preferred_element_type=jnp.float32) + bqkv_ref[0]      # (N, 3D) f32
    q = qkv[:, 0 * D:1 * D].reshape(batch, seq, D)               # lane-aligned slices
    k = qkv[:, 1 * D:2 * D].reshape(batch, seq, D)
    v = qkv[:, 2 * D:3 * D].reshape(batch, seq, D)

    # Head split via static lane slices -> leading (H*B) batch axis.  Attention then
    # contracts only head_dim (no masked-lane waste) and runs per sequence (no
    # cross-sequence block-diagonal waste).
    def split_heads(t):                                          # (B, L, D) -> (H*B, L, dh)
        parts = [t[:, :, hh * head_dim:(hh + 1) * head_dim] for hh in range(num_heads)]
        return jnp.stack(parts, axis=0).reshape(num_heads * batch, seq, head_dim)

    qh = split_heads(q)
    kh = split_heads(k)
    vh = split_heads(v)

    scores = jnp.einsum("zqd,zkd->zqk",
                        qh.astype(MXU_DTYPE), kh.astype(MXU_DTYPE),
                        preferred_element_type=jnp.float32)      # (H*B, L, L)
    scores = scores + mask_ref[...][None, :, :]                  # causal bias (hoisted)
    scores = scores - jnp.max(scores, axis=-1, keepdims=True)
    p = jnp.exp(scores)
    p = p / jnp.sum(p, axis=-1, keepdims=True)                   # exact softmax (f32)

    ctx = jnp.einsum("zqk,zkd->zqd",
                     p.astype(MXU_DTYPE), vh.astype(MXU_DTYPE),
                     preferred_element_type=jnp.float32)         # (H*B, L, dh)
    ctx = ctx.reshape(num_heads, batch, seq, head_dim)
    attn = jnp.concatenate([ctx[hh] for hh in range(num_heads)], axis=-1)  # (B, L, D)
    attn = attn.reshape(batch * seq, D)

    attn = jnp.dot(attn.astype(MXU_DTYPE), wo_ref[0],
                   preferred_element_type=jnp.float32) + bo_ref[0]
    x = x + attn                                                 # residual 1

    # ---------------- LayerNorm 2 + QuickGELU MLP --------------------------------
    h = layer_norm(x, ln2_g_ref[0], ln2_b_ref[0])
    h1 = jnp.dot(h.astype(MXU_DTYPE), w1_ref[0],
                 preferred_element_type=jnp.float32) + b1_ref[0]
    h1 = h1 * jax.nn.sigmoid(1.702 * h1)                         # QuickGELU (f32 VPU/EUP)
    h2 = jnp.dot(h1.astype(MXU_DTYPE), w2_ref[0],
                 preferred_element_type=jnp.float32) + b2_ref[0]
    x = x + h2                                                   # residual 2

    o_ref[...] = x                                               # carry to next layer (resident)

    # Final LayerNorm fused into the last layer; only HBM writeback of the run.
    @pl.when(layer == n_layers - 1)
    def _():
        o_ref[...] = layer_norm(x, fin_g_ref[...], fin_b_ref[...])


# ----------------------------- wrapper --------------------------------------------
def run_fused_encoder(hidden, sp, final_g, final_b):
    """hidden: (B, L, D) f32; sp: stacked per-layer params; returns (B, L, D) f32."""
    B, L, D = hidden.shape
    N = B * L
    I = sp["w1"].shape[-1]
    x2 = hidden.reshape(N, D).astype(jnp.float32)     # lane-dense (B*L, D) slab

    per3 = lambda shape: pl.BlockSpec(shape, lambda l: (l, 0, 0))    # per-layer block
    const2 = lambda shape: pl.BlockSpec(shape, lambda l: (0, 0))     # resident block

    in_specs = [
        pl.BlockSpec(memory_space=pl.ANY),             # x: raw HBM ref, DMA'd once @ layer 0
        per3((1, 1, D)), per3((1, 1, D)),              # ln1 gamma / beta
        per3((1, D, 3 * D)), per3((1, 1, 3 * D)),      # Wqkv (q pre-scaled), bqkv
        per3((1, D, D)), per3((1, 1, D)),              # Wo, bo
        per3((1, 1, D)), per3((1, 1, D)),              # ln2 gamma / beta
        per3((1, D, I)), per3((1, 1, I)),              # fc1
        per3((1, I, D)), per3((1, 1, D)),              # fc2
        const2((1, D)), const2((1, D)),                # final LayerNorm gamma / beta
    ]
    out_spec = const2((N, D))                          # constant index -> resident accumulator

    kernel = functools.partial(
        clip_encoder_stack_kernel,
        batch=B, seq=L, num_heads=HEADS, head_dim=HEAD_DIM)

    # TODO(synk): on v7x (2 TensorCores) add a leading "parallel" grid axis over the
    # batch (sequences are independent) so both cores get work; at toy shapes a single
    # core is optimal.  When scaling to real CLIP sizes: batch so B*L >= 128 rows per
    # matmul, keep bf16 weights, and raise vmem_limit_bytes (v6e) / re-derive the
    # weight double-buffer budget against 64 MiB (v7x).
    out = pl.pallas_call(
        kernel,
        out_shape=jax.ShapeDtypeStruct((N, D), jnp.float32),
        grid_spec=pltpu.PrefetchScalarGridSpec(
            num_scalar_prefetch=0,
            grid=(LAYERS,),
            in_specs=in_specs,
            out_specs=out_spec,
            scratch_shapes=[
                pltpu.VMEM((L, L), jnp.float32),       # causal bias, built once @ layer 0
                pltpu.SemaphoreType.DMA((1,)),         # layer-0 input DMA semaphore
            ],
        ),
        compiler_params=pltpu.CompilerParams(
            dimension_semantics=("arbitrary",),        # layers are sequential
            vmem_limit_bytes=32 * 1024 * 1024,
        ),
    )(
        x2,
        sp["ln1_g"], sp["ln1_b"],
        sp["wqkv"], sp["bqkv"],
        sp["wo"], sp["bo"],
        sp["ln2_g"], sp["ln2_b"],
        sp["w1"], sp["b1"], sp["w2"], sp["b2"],
        final_g, final_b,
    )
    return out.reshape(B, L, D)


def clip_text_model_forward(input_tokens, params, stacked):
    """input_tokens: (B, L) int32 -> (B, L, HIDDEN) f32."""
    B, L = input_tokens.shape
    # Embedding gathers are plain-JAX glue (token + position lookup).
    tok_emb = jnp.take(params["token_embedding"], input_tokens, axis=0)   # (B, L, D)
    pos_emb = params["position_embedding"][:L][None, :, :]                # (1, L, D)
    hidden = (tok_emb + pos_emb).astype(jnp.float32)
    return run_fused_encoder(hidden, stacked, params["final_ln_g"], params["final_ln_b"])


# ----------------------------- parameters ------------------------------------------
def init_params(key):
    D, I = HIDDEN, INTERMEDIATE
    n_per_layer = 8
    keys = jax.random.split(key, 2 + LAYERS * n_per_layer)

    def lin(k, fan_in, fan_out):
        w = jax.random.normal(k, (fan_in, fan_out), jnp.float32) * 0.02
        b = jnp.zeros((1, fan_out), jnp.float32)
        return w, b

    params = {
        "token_embedding": jax.random.normal(keys[0], (VOCAB, D), jnp.float32) * 0.02,
        "position_embedding": jax.random.normal(keys[1], (MAX_POS, D), jnp.float32) * 0.02,
        "final_ln_g": jnp.ones((1, D), jnp.float32),
        "final_ln_b": jnp.zeros((1, D), jnp.float32),
        "layers": [],
    }
    for li in range(LAYERS):
        kbase = 2 + li * n_per_layer
        wq, bq = lin(keys[kbase + 0], D, D)
        wk, bk = lin(keys[kbase + 1], D, D)
        wv, bv = lin(keys[kbase + 2], D, D)
        wo, bo = lin(keys[kbase + 3], D, D)
        w1, b1 = lin(keys[kbase + 4], D, I)
        w2, b2 = lin(keys[kbase + 5], I, D)
        params["layers"].append({
            "ln1_g": jnp.ones((1, D), jnp.float32), "ln1_b": jnp.zeros((1, D), jnp.float32),
            "wq": wq, "bq": bq, "wk": wk, "bk": bk, "wv": wv, "bv": bv, "wo": wo, "bo": bo,
            "ln2_g": jnp.ones((1, D), jnp.float32), "ln2_b": jnp.zeros((1, D), jnp.float32),
            "w1": w1, "b1": b1, "w2": w2, "b2": b2,
        })
    return params


def prepare_fused_params(params):
    """Stack per-layer params to (LAYERS, ...), fuse Wq/Wk/Wv -> Wqkv (scale folded into
    the q slice), and cast matmul weights to MXU_DTYPE (bf16)."""
    scale = HEAD_DIM ** (-0.5)
    layers = params["layers"]

    def stack(name):
        return jnp.stack([lp[name] for lp in layers], axis=0)

    wq = jnp.stack([lp["wq"] * scale for lp in layers], axis=0)   # fold 1/sqrt(head_dim)
    bq = jnp.stack([lp["bq"] * scale for lp in layers], axis=0)
    wqkv = jnp.concatenate([wq, stack("wk"), stack("wv")], axis=-1)   # (LAYERS, D, 3D)
    bqkv = jnp.concatenate([bq, stack("bk"), stack("bv")], axis=-1)   # (LAYERS, 1, 3D)

    return {
        "ln1_g": stack("ln1_g"), "ln1_b": stack("ln1_b"),
        "wqkv": wqkv.astype(MXU_DTYPE), "bqkv": bqkv,                 # biases stay f32
        "wo": stack("wo").astype(MXU_DTYPE), "bo": stack("bo"),
        "ln2_g": stack("ln2_g"), "ln2_b": stack("ln2_b"),
        "w1": stack("w1").astype(MXU_DTYPE), "b1": stack("b1"),
        "w2": stack("w2").astype(MXU_DTYPE), "b2": stack("b2"),
    }


# ----------------------------- main -------------------------------------------------
if __name__ == "__main__":
    key = jax.random.PRNGKey(0)
    pkey, tkey = jax.random.split(key)

    params = init_params(pkey)
    stacked = prepare_fused_params(params)

    B, L = 2, 8
    input_tokens = jax.random.randint(tkey, (B, L), 0, VOCAB, dtype=jnp.int32)

    out = clip_text_model_forward(input_tokens, params, stacked)
    out = jax.block_until_ready(out)

    assert out.shape == (B, L, HIDDEN) and out.dtype == jnp.float32
    assert bool(jnp.all(jnp.isfinite(out)))
    print("KERNEL_OK")
</pallas_src>

<mosaic_0001>
module attributes {stable_mosaic.version = 11 : i64} {
  func.func @clip_encoder_stack_kernel(%arg0: i32, %arg1: memref<16x128xf32, #tpu.memory_space<any>>, %arg2: memref<1x1x128xf32, #tpu.memory_space<vmem>>, %arg3: memref<1x1x128xf32, #tpu.memory_space<vmem>>, %arg4: memref<1x128x384xbf16, #tpu.memory_space<vmem>>, %arg5: memref<1x1x384xf32, #tpu.memory_space<vmem>>, %arg6: memref<1x128x128xbf16, #tpu.memory_space<vmem>>, %arg7: memref<1x1x128xf32, #tpu.memory_space<vmem>>, %arg8: memref<1x1x128xf32, #tpu.memory_space<vmem>>, %arg9: memref<1x1x128xf32, #tpu.memory_space<vmem>>, %arg10: memref<1x128x256xbf16, #tpu.memory_space<vmem>>, %arg11: memref<1x1x256xf32, #tpu.memory_space<vmem>>, %arg12: memref<1x256x128xbf16, #tpu.memory_space<vmem>>, %arg13: memref<1x1x128xf32, #tpu.memory_space<vmem>>, %arg14: memref<1x128xf32, #tpu.memory_space<vmem>>, %arg15: memref<1x128xf32, #tpu.memory_space<vmem>>, %arg16: memref<16x128xf32, #tpu.memory_space<vmem>>, %arg17: memref<8x8xf32, #tpu.memory_space<vmem>>, %arg18: memref<1x!tpu.dma_semaphore, #tpu.memory_space<semaphore_mem>>) attributes {dimension_semantics = [#tpu.dimension_semantics<arbitrary>], iteration_bounds = array<i64: 2>, scalar_prefetch = 0 : i64, scratch_operands = 2 : i64, tpu.core_type = #tpu.core_type<tc>, window_params = [{}, {transform_indices = @transform_1, window_bounds = array<i64: 1, 1, 128>}, {transform_indices = @transform_2, window_bounds = array<i64: 1, 1, 128>}, {transform_indices = @transform_3, window_bounds = array<i64: 1, 128, 384>}, {transform_indices = @transform_4, window_bounds = array<i64: 1, 1, 384>}, {transform_indices = @transform_5, window_bounds = array<i64: 1, 128, 128>}, {transform_indices = @transform_6, window_bounds = array<i64: 1, 1, 128>}, {transform_indices = @transform_7, window_bounds = array<i64: 1, 1, 128>}, {transform_indices = @transform_8, window_bounds = array<i64: 1, 1, 128>}, {transform_indices = @transform_9, window_bounds = array<i64: 1, 128, 256>}, {transform_indices = @transform_10, window_bounds = array<i64: 1, 1, 256>}, {transform_indices = @transform_11, window_bounds = array<i64: 1, 256, 128>}, {transform_indices = @transform_12, window_bounds = array<i64: 1, 1, 128>}, {pipeline_mode = #tpu.pipeline_mode<synchronous>, transform_indices = @transform_13, window_bounds = array<i64: 1, 128>}, {pipeline_mode = #tpu.pipeline_mode<synchronous>, transform_indices = @transform_14, window_bounds = array<i64: 1, 128>}, {pipeline_mode = #tpu.pipeline_mode<synchronous>, transform_indices = @transform_15, window_bounds = array<i64: 16, 128>}]} {
    %c0_i32 = arith.constant 0 : i32
    %0 = arith.cmpi eq, %arg0, %c0_i32 : i32
    %1 = arith.extui %0 : i1 to i32
    %c0_i32_0 = arith.constant 0 : i32
    %2 = arith.cmpi ne, %1, %c0_i32_0 : i32
    scf.if %2 {
      %c0_i32_62 = arith.constant 0 : i32
      %168 = tpu.memref_slice %arg18[%c0_i32_62] : memref<1x!tpu.dma_semaphore, #tpu.memory_space<semaphore_mem>> -> memref<1x!tpu.dma_semaphore, #tpu.memory_space<semaphore_mem>>
      %169 = tpu.memref_squeeze %168 : memref<1x!tpu.dma_semaphore, #tpu.memory_space<semaphore_mem>> -> memref<!tpu.dma_semaphore, #tpu.memory_space<semaphore_mem>>
      tpu.enqueue_dma source(%arg1 : memref<16x128xf32, #tpu.memory_space<any>>) target(%arg16 : memref<16x128xf32, #tpu.memory_space<vmem>>) target_semaphore(%169 : memref<!tpu.dma_semaphore, #tpu.memory_space<semaphore_mem>>)
      %170 = tpu.iota {dimensions = array<i32: 0>} : vector<8x8xi32>
      %171 = tpu.iota {dimensions = array<i32: 1>} : vector<8x8xi32>
      %172 = arith.cmpi sle, %171, %170 : vector<8x8xi32>
      %cst_63 = arith.constant 0.000000e+00 : f32
      %cst_64 = arith.constant -1.000000e+09 : f32
      %173 = vector.broadcast %cst_63 : f32 to vector<8x8xf32>
      %174 = vector.broadcast %cst_64 : f32 to vector<8x8xf32>
      %175 = arith.select %172, %173, %174 : vector<8x8xi1>, vector<8x8xf32>
      %c0_65 = arith.constant 0 : index
      %c0_66 = arith.constant 0 : index
      %176 = vector.load %arg17[%c0_65, %c0_66] : memref<8x8xf32, #tpu.memory_space<vmem>>, vector<8x8xf32>
      tpu.vector_store %arg17[%c0_65, %c0_66], %175 {strides = array<i32>} : memref<8x8xf32, #tpu.memory_space<vmem>>, vector<8x8xf32>,
      %c0_i32_67 = arith.constant 0 : i32
      %177 = tpu.memref_slice %arg18[%c0_i32_67] : memref<1x!tpu.dma_semaphore, #tpu.memory_space<semaphore_mem>> -> memref<1x!tpu.dma_semaphore, #tpu.memory_space<semaphore_mem>>
      %178 = tpu.memref_squeeze %177 : memref<1x!tpu.dma_semaphore, #tpu.memory_space<semaphore_mem>> -> memref<!tpu.dma_semaphore, #tpu.memory_space<semaphore_mem>>
      tpu.wait_dma2 semaphore(%178 : memref<!tpu.dma_semaphore, #tpu.memory_space<semaphore_mem>>) src(%arg1 : memref<16x128xf32, #tpu.memory_space<any>>) dst(%arg16 : memref<16x128xf32, #tpu.memory_space<vmem>>)
    } else {
    }
    %c0 = arith.constant 0 : index
    %c0_1 = arith.constant 0 : index
    %3 = vector.load %arg16[%c0, %c0_1] : memref<16x128xf32, #tpu.memory_space<vmem>>, vector<16x128xf32>
    %c0_2 = arith.constant 0 : index
    %c0_3 = arith.constant 0 : index
    %c0_4 = arith.constant 0 : index
    %4 = vector.load %arg2[%c0_2, %c0_3, %c0_4] : memref<1x1x128xf32, #tpu.memory_space<vmem>>, vector<1x1x128xf32>
    %5 = vector.shape_cast %4 : vector<1x1x128xf32> to vector<1x128xf32>
    %c0_5 = arith.constant 0 : index
    %c0_6 = arith.constant 0 : index
    %c0_7 = arith.constant 0 : index
    %6 = vector.load %arg3[%c0_5, %c0_6, %c0_7] : memref<1x1x128xf32, #tpu.memory_space<vmem>>, vector<1x1x128xf32>
    %7 = vector.shape_cast %6 : vector<1x1x128xf32> to vector<1x128xf32>
    %cst = arith.constant dense<0.000000e+00> : vector<16xf32>
    %8 = vector.multi_reduction <add>, %3, %cst [1] : vector<16x128xf32> to vector<16xf32>
    %9 = vector.shape_cast %8 : vector<16xf32> to vector<16x1xf32>
    %cst_8 = arith.constant 1.280000e+02 : f32
    %10 = vector.broadcast %cst_8 : f32 to vector<16x1xf32>
    %11 = arith.divf %9, %10 : vector<16x1xf32>
    %12 = vector.broadcast %11 : vector<16x1xf32> to vector<16x128xf32>
    %13 = arith.subf %3, %12 : vector<16x128xf32>
    %14 = arith.mulf %13, %13 : vector<16x128xf32>
    %cst_9 = arith.constant dense<0.000000e+00> : vector<16xf32>
    %15 = vector.multi_reduction <add>, %14, %cst_9 [1] : vector<16x128xf32> to vector<16xf32>
    %16 = vector.shape_cast %15 : vector<16xf32> to vector<16x1xf32>
    %cst_10 = arith.constant 1.280000e+02 : f32
    %17 = vector.broadcast %cst_10 : f32 to vector<16x1xf32>
    %18 = arith.divf %16, %17 : vector<16x1xf32>
    %19 = vector.broadcast %11 : vector<16x1xf32> to vector<16x128xf32>
    %20 = arith.subf %3, %19 : vector<16x128xf32>
    %cst_11 = arith.constant 9.99999974E-6 : f32
    %21 = vector.broadcast %cst_11 : f32 to vector<16x1xf32>
    %22 = arith.addf %18, %21 : vector<16x1xf32>
    %23 = math.rsqrt %22 : vector<16x1xf32>
    %24 = vector.broadcast %23 : vector<16x1xf32> to vector<16x128xf32>
    %25 = arith.mulf %20, %24 : vector<16x128xf32>
    %26 = vector.broadcast %5 : vector<1x128xf32> to vector<16x128xf32>
    %27 = arith.mulf %25, %26 : vector<16x128xf32>
    %28 = vector.broadcast %7 : vector<1x128xf32> to vector<16x128xf32>
    %29 = arith.addf %27, %28 : vector<16x128xf32>
    %30 = arith.truncf %29 : vector<16x128xf32> to vector<16x128xbf16>
    %c0_12 = arith.constant 0 : index
    %c0_13 = arith.constant 0 : index
    %c0_14 = arith.constant 0 : index
    %31 = vector.load %arg4[%c0_12, %c0_13, %c0_14] : memref<1x128x384xbf16, #tpu.memory_space<vmem>>, vector<1x128x384xbf16>
    %32 = vector.shape_cast %31 : vector<1x128x384xbf16> to vector<128x384xbf16>
    %cst_15 = arith.constant dense<0.000000e+00> : vector<16x384xf32>
    %33 = tpu.matmul %30, %32, %cst_15 {dimension_numbers = #tpu.dot_dimension_numbers<[1], [0], [0], [1], [0, 0, 1, 1], [], []>} : vector<16x128xbf16>, vector<128x384xbf16>, vector<16x384xf32> -> vector<16x384xf32>
    %c0_16 = arith.constant 0 : index
    %c0_17 = arith.constant 0 : index
    %c0_18 = arith.constant 0 : index
    %34 = vector.load %arg5[%c0_16, %c0_17, %c0_18] : memref<1x1x384xf32, #tpu.memory_space<vmem>>, vector<1x1x384xf32>
    %35 = vector.shape_cast %34 : vector<1x1x384xf32> to vector<1x384xf32>
    %36 = vector.broadcast %35 : vector<1x384xf32> to vector<16x384xf32>
    %37 = arith.addf %33, %36 : vector<16x384xf32>
    %38 = vector.extract_strided_slice %37 {offsets = [0, 0], sizes = [16, 128], strides = [1, 1]} : vector<16x384xf32> to vector<16x128xf32>
    %39 = vector.shape_cast %38 : vector<16x128xf32> to vector<2x8x128xf32>
    %40 = vector.extract_strided_slice %37 {offsets = [0, 128], sizes = [16, 128], strides = [1, 1]} : vector<16x384xf32> to vector<16x128xf32>
    %41 = vector.shape_cast %40 : vector<16x128xf32> to vector<2x8x128xf32>
    %42 = vector.extract_strided_slice %37 {offsets = [0, 256], sizes = [16, 128], strides = [1, 1]} : vector<16x384xf32> to vector<16x128xf32>
    %43 = vector.shape_cast %42 : vector<16x128xf32> to vector<2x8x128xf32>
    %44 = vector.extract_strided_slice %39 {offsets = [0, 0, 0], sizes = [2, 8, 32], strides = [1, 1, 1]} : vector<2x8x128xf32> to vector<2x8x32xf32>
    %45 = vector.extract_strided_slice %39 {offsets = [0, 0, 32], sizes = [2, 8, 32], strides = [1, 1, 1]} : vector<2x8x128xf32> to vector<2x8x32xf32>
    %46 = vector.extract_strided_slice %39 {offsets = [0, 0, 64], sizes = [2, 8, 32], strides = [1, 1, 1]} : vector<2x8x128xf32> to vector<2x8x32xf32>
    %47 = vector.extract_strided_slice %39 {offsets = [0, 0, 96], sizes = [2, 8, 32], strides = [1, 1, 1]} : vector<2x8x128xf32> to vector<2x8x32xf32>
    %48 = vector.shape_cast %44 : vector<2x8x32xf32> to vector<1x2x8x32xf32>
    %49 = vector.shape_cast %45 : vector<2x8x32xf32> to vector<1x2x8x32xf32>
    %50 = vector.shape_cast %46 : vector<2x8x32xf32> to vector<1x2x8x32xf32>
    %51 = vector.shape_cast %47 : vector<2x8x32xf32> to vector<1x2x8x32xf32>
    %52 = tpu.concatenate %48, %49, %50, %51 in 0 : vector<1x2x8x32xf32>, vector<1x2x8x32xf32>, vector<1x2x8x32xf32>, vector<1x2x8x32xf32> -> vector<4x2x8x32xf32>
    %53 = vector.shape_cast %52 : vector<4x2x8x32xf32> to vector<8x8x32xf32>
    %54 = vector.extract_strided_slice %41 {offsets = [0, 0, 0], sizes = [2, 8, 32], strides = [1, 1, 1]} : vector<2x8x128xf32> to vector<2x8x32xf32>
    %55 = vector.extract_strided_slice %41 {offsets = [0, 0, 32], sizes = [2, 8, 32], strides = [1, 1, 1]} : vector<2x8x128xf32> to vector<2x8x32xf32>
    %56 = vector.extract_strided_slice %41 {offsets = [0, 0, 64], sizes = [2, 8, 32], strides = [1, 1, 1]} : vector<2x8x128xf32> to vector<2x8x32xf32>
    %57 = vector.extract_strided_slice %41 {offsets = [0, 0, 96], sizes = [2, 8, 32], strides = [1, 1, 1]} : vector<2x8x128xf32> to vector<2x8x32xf32>
    %58 = vector.shape_cast %54 : vector<2x8x32xf32> to vector<1x2x8x32xf32>
    %59 = vector.shape_cast %55 : vector<2x8x32xf32> to vector<1x2x8x32xf32>
    %60 = vector.shape_cast %56 : vector<2x8x32xf32> to vector<1x2x8x32xf32>
    %61 = vector.shape_cast %57 : vector<2x8x32xf32> to vector<1x2x8x32xf32>
    %62 = tpu.concatenate %58, %59, %60, %61 in 0 : vector<1x2x8x32xf32>, vector<1x2x8x32xf32>, vector<1x2x8x32xf32>, vector<1x2x8x32xf32> -> vector<4x2x8x32xf32>
    %63 = vector.shape_cast %62 : vector<4x2x8x32xf32> to vector<8x8x32xf32>
    %64 = vector.extract_strided_slice %43 {offsets = [0, 0, 0], sizes = [2, 8, 32], strides = [1, 1, 1]} : vector<2x8x128xf32> to vector<2x8x32xf32>
    %65 = vector.extract_strided_slice %43 {offsets = [0, 0, 32], sizes = [2, 8, 32], strides = [1, 1, 1]} : vector<2x8x128xf32> to vector<2x8x32xf32>
    %66 = vector.extract_strided_slice %43 {offsets = [0, 0, 64], sizes = [2, 8, 32], strides = [1, 1, 1]} : vector<2x8x128xf32> to vector<2x8x32xf32>
    %67 = vector.extract_strided_slice %43 {offsets = [0, 0, 96], sizes = [2, 8, 32], strides = [1, 1, 1]} : vector<2x8x128xf32> to vector<2x8x32xf32>
    %68 = vector.shape_cast %64 : vector<2x8x32xf32> to vector<1x2x8x32xf32>
    %69 = vector.shape_cast %65 : vector<2x8x32xf32> to vector<1x2x8x32xf32>
    %70 = vector.shape_cast %66 : vector<2x8x32xf32> to vector<1x2x8x32xf32>
    %71 = vector.shape_cast %67 : vector<2x8x32xf32> to vector<1x2x8x32xf32>
    %72 = tpu.concatenate %68, %69, %70, %71 in 0 : vector<1x2x8x32xf32>, vector<1x2x8x32xf32>, vector<1x2x8x32xf32>, vector<1x2x8x32xf32> -> vector<4x2x8x32xf32>
    %73 = vector.shape_cast %72 : vector<4x2x8x32xf32> to vector<8x8x32xf32>
    %74 = arith.truncf %53 : vector<8x8x32xf32> to vector<8x8x32xbf16>
    %75 = arith.truncf %63 : vector<8x8x32xf32> to vector<8x8x32xbf16>
    "tpu.trace_start"() <{level = 10 : i32, message = "zqd,zkd->zqk"}> : () -> ()
    %cst_19 = arith.constant dense<0.000000e+00> : vector<8x8x8xf32>
    %76 = tpu.matmul %74, %75, %cst_19 {dimension_numbers = #tpu.dot_dimension_numbers<[2], [2], [1], [1], [0, 0, 0, 1, 1, 1], [0], [0]>} : vector<8x8x32xbf16>, vector<8x8x32xbf16>, vector<8x8x8xf32> -> vector<8x8x8xf32>
    "tpu.trace_stop"() : () -> ()
    %c0_20 = arith.constant 0 : index
    %c0_21 = arith.constant 0 : index
    %77 = vector.load %arg17[%c0_20, %c0_21] : memref<8x8xf32, #tpu.memory_space<vmem>>, vector<8x8xf32>
    %78 = vector.shape_cast %77 : vector<8x8xf32> to vector<1x8x8xf32>
    %79 = vector.broadcast %78 : vector<1x8x8xf32> to vector<8x8x8xf32>
    %80 = arith.addf %76, %79 : vector<8x8x8xf32>
    %cst_22 = arith.constant dense<0xFF800000> : vector<8x8xf32>
    %81 = vector.multi_reduction <maximumf>, %80, %cst_22 [2] : vector<8x8x8xf32> to vector<8x8xf32>
    %82 = vector.shape_cast %81 : vector<8x8xf32> to vector<8x8x1xf32>
    %83 = vector.broadcast %82 : vector<8x8x1xf32> to vector<8x8x8xf32>
    %84 = arith.subf %80, %83 : vector<8x8x8xf32>
    %85 = math.exp %84 : vector<8x8x8xf32>
    %cst_23 = arith.constant dense<0.000000e+00> : vector<8x8xf32>
    %86 = vector.multi_reduction <add>, %85, %cst_23 [2] : vector<8x8x8xf32> to vector<8x8xf32>
    %87 = vector.shape_cast %86 : vector<8x8xf32> to vector<8x8x1xf32>
    %88 = vector.broadcast %87 : vector<8x8x1xf32> to vector<8x8x8xf32>
    %89 = arith.divf %85, %88 : vector<8x8x8xf32>
    %90 = arith.truncf %89 : vector<8x8x8xf32> to vector<8x8x8xbf16>
    %91 = arith.truncf %73 : vector<8x8x32xf32> to vector<8x8x32xbf16>
    "tpu.trace_start"() <{level = 10 : i32, message = "zqk,zkd->zqd"}> : () -> ()
    %cst_24 = arith.constant dense<0.000000e+00> : vector<8x8x32xf32>
    %92 = tpu.matmul %90, %91, %cst_24 {dimension_numbers = #tpu.dot_dimension_numbers<[2], [1], [1], [2], [0, 0, 0, 1, 1, 2], [0], [0]>} : vector<8x8x8xbf16>, vector<8x8x32xbf16>, vector<8x8x32xf32> -> vector<8x8x32xf32>
    "tpu.trace_stop"() : () -> ()
    %93 = vector.shape_cast %92 : vector<8x8x32xf32> to vector<4x2x8x32xf32>
    %94 = vector.extract_strided_slice %93 {offsets = [0, 0, 0, 0], sizes = [1, 2, 8, 32], strides = [1, 1, 1, 1]} : vector<4x2x8x32xf32> to vector<1x2x8x32xf32>
    %95 = vector.shape_cast %94 : vector<1x2x8x32xf32> to vector<2x8x32xf32>
    %96 = vector.extract_strided_slice %93 {offsets = [1, 0, 0, 0], sizes = [1, 2, 8, 32], strides = [1, 1, 1, 1]} : vector<4x2x8x32xf32> to vector<1x2x8x32xf32>
    %97 = vector.shape_cast %96 : vector<1x2x8x32xf32> to vector<2x8x32xf32>
    %98 = vector.extract_strided_slice %93 {offsets = [2, 0, 0, 0], sizes = [1, 2, 8, 32], strides = [1, 1, 1, 1]} : vector<4x2x8x32xf32> to vector<1x2x8x32xf32>
    %99 = vector.shape_cast %98 : vector<1x2x8x32xf32> to vector<2x8x32xf32>
    %100 = vector.extract_strided_slice %93 {offsets = [3, 0, 0, 0], sizes = [1, 2, 8, 32], strides = [1, 1, 1, 1]} : vector<4x2x8x32xf32> to vector<1x2x8x32xf32>
    %101 = vector.shape_cast %100 : vector<1x2x8x32xf32> to vector<2x8x32xf32>
    %102 = tpu.concatenate %95, %97, %99, %101 in 2 : vector<2x8x32xf32>, vector<2x8x32xf32>, vector<2x8x32xf32>, vector<2x8x32xf32> -> vector<2x8x128xf32>
    %103 = vector.shape_cast %102 : vector<2x8x128xf32> to vector<16x128xf32>
    %104 = arith.truncf %103 : vector<16x128xf32> to vector<16x128xbf16>
    %c0_25 = arith.constant 0 : index
    %c0_26 = arith.constant 0 : index
    %c0_27 = arith.constant 0 : index
    %105 = vector.load %arg6[%c0_25, %c0_26, %c0_27] : memref<1x128x128xbf16, #tpu.memory_space<vmem>>, vector<1x128x128xbf16>
    %106 = vector.shape_cast %105 : vector<1x128x128xbf16> to vector<128x128xbf16>
    %cst_28 = arith.constant dense<0.000000e+00> : vector<16x128xf32>
    %107 = tpu.matmul %104, %106, %cst_28 {dimension_numbers = #tpu.dot_dimension_numbers<[1], [0], [0], [1], [0, 0, 1, 1], [], []>} : vector<16x128xbf16>, vector<128x128xbf16>, vector<16x128xf32> -> vector<16x128xf32>
    %c0_29 = arith.constant 0 : index
    %c0_30 = arith.constant 0 : index
    %c0_31 = arith.constant 0 : index
    %108 = vector.load %arg7[%c0_29, %c0_30, %c0_31] : memref<1x1x128xf32, #tpu.memory_space<vmem>>, vector<1x1x128xf32>
    %109 = vector.shape_cast %108 : vector<1x1x128xf32> to vector<1x128xf32>
    %110 = vector.broadcast %109 : vector<1x128xf32> to vector<16x128xf32>
    %111 = arith.addf %107, %110 : vector<16x128xf32>
    %112 = arith.addf %3, %111 : vector<16x128xf32>
    %c0_32 = arith.constant 0 : index
    %c0_33 = arith.constant 0 : index
    %c0_34 = arith.constant 0 : index
    %113 = vector.load %arg8[%c0_32, %c0_33, %c0_34] : memref<1x1x128xf32, #tpu.memory_space<vmem>>, vector<1x1x128xf32>
    %114 = vector.shape_cast %113 : vector<1x1x128xf32> to vector<1x128xf32>
    %c0_35 = arith.constant 0 : index
    %c0_36 = arith.constant 0 : index
    %c0_37 = arith.constant 0 : index
    %115 = vector.load %arg9[%c0_35, %c0_36, %c0_37] : memref<1x1x128xf32, #tpu.memory_space<vmem>>, vector<1x1x128xf32>
    %116 = vector.shape_cast %115 : vector<1x1x128xf32> to vector<1x128xf32>
    %cst_38 = arith.constant dense<0.000000e+00> : vector<16xf32>
    %117 = vector.multi_reduction <add>, %112, %cst_38 [1] : vector<16x128xf32> to vector<16xf32>
    %118 = vector.shape_cast %117 : vector<16xf32> to vector<16x1xf32>
    %cst_39 = arith.constant 1.280000e+02 : f32
    %119 = vector.broadcast %cst_39 : f32 to vector<16x1xf32>
    %120 = arith.divf %118, %119 : vector<16x1xf32>
    %121 = vector.broadcast %120 : vector<16x1xf32> to vector<16x128xf32>
    %122 = arith.subf %112, %121 : vector<16x128xf32>
    %123 = arith.mulf %122, %122 : vector<16x128xf32>
    %cst_40 = arith.constant dense<0.000000e+00> : vector<16xf32>
    %124 = vector.multi_reduction <add>, %123, %cst_40 [1] : vector<16x128xf32> to vector<16xf32>
    %125 = vector.shape_cast %124 : vector<16xf32> to vector<16x1xf32>
    %cst_41 = arith.constant 1.280000e+02 : f32
    %126 = vector.broadcast %cst_41 : f32 to vector<16x1xf32>
    %127 = arith.divf %125, %126 : vector<16x1xf32>
    %128 = vector.broadcast %120 : vector<16x1xf32> to vector<16x128xf32>
    %129 = arith.subf %112, %128 : vector<16x128xf32>
    %cst_42 = arith.constant 9.99999974E-6 : f32
    %130 = vector.broadcast %cst_42 : f32 to vector<16x1xf32>
    %131 = arith.addf %127, %130 : vector<16x1xf32>
    %132 = math.rsqrt %131 : vector<16x1xf32>
    %133 = vector.broadcast %132 : vector<16x1xf32> to vector<16x128xf32>
    %134 = arith.mulf %129, %133 : vector<16x128xf32>
    %135 = vector.broadcast %114 : vector<1x128xf32> to vector<16x128xf32>
    %136 = arith.mulf %134, %135 : vector<16x128xf32>
    %137 = vector.broadcast %116 : vector<1x128xf32> to vector<16x128xf32>
    %138 = arith.addf %136, %137 : vector<16x128xf32>
    %139 = arith.truncf %138 : vector<16x128xf32> to vector<16x128xbf16>
    %c0_43 = arith.constant 0 : index
    %c0_44 = arith.constant 0 : index
    %c0_45 = arith.constant 0 : index
    %140 = vector.load %arg10[%c0_43, %c0_44, %c0_45] : memref<1x128x256xbf16, #tpu.memory_space<vmem>>, vector<1x128x256xbf16>
    %141 = vector.shape_cast %140 : vector<1x128x256xbf16> to vector<128x256xbf16>
    %cst_46 = arith.constant dense<0.000000e+00> : vector<16x256xf32>
    %142 = tpu.matmul %139, %141, %cst_46 {dimension_numbers = #tpu.dot_dimension_numbers<[1], [0], [0], [1], [0, 0, 1, 1], [], []>} : vector<16x128xbf16>, vector<128x256xbf16>, vector<16x256xf32> -> vector<16x256xf32>
    %c0_47 = arith.constant 0 : index
    %c0_48 = arith.constant 0 : index
    %c0_49 = arith.constant 0 : index
    %143 = vector.load %arg11[%c0_47, %c0_48, %c0_49] : memref<1x1x256xf32, #tpu.memory_space<vmem>>, vector<1x1x256xf32>
    %144 = vector.shape_cast %143 : vector<1x1x256xf32> to vector<1x256xf32>
    %145 = vector.broadcast %144 : vector<1x256xf32> to vector<16x256xf32>
    %146 = arith.addf %142, %145 : vector<16x256xf32>
    %cst_50 = arith.constant 1.702000e+00 : f32
    %147 = vector.broadcast %cst_50 : f32 to vector<16x256xf32>
    %148 = arith.mulf %147, %146 : vector<16x256xf32>
    %149 = arith.negf %148 : vector<16x256xf32>
    %150 = math.exp %149 : vector<16x256xf32>
    %cst_51 = arith.constant 1.000000e+00 : f32
    %151 = vector.broadcast %cst_51 : f32 to vector<16x256xf32>
    %152 = arith.addf %151, %150 : vector<16x256xf32>
    %153 = arith.divf %151, %152 : vector<16x256xf32>
    %154 = arith.mulf %146, %153 : vector<16x256xf32>
    %155 = arith.truncf %154 : vector<16x256xf32> to vector<16x256xbf16>
    %c0_52 = arith.constant 0 : index
    %c0_53 = arith.constant 0 : index
    %c0_54 = arith.constant 0 : index
    %156 = vector.load %arg12[%c0_52, %c0_53, %c0_54] : memref<1x256x128xbf16, #tpu.memory_space<vmem>>, vector<1x256x128xbf16>
    %157 = vector.shape_cast %156 : vector<1x256x128xbf16> to vector<256x128xbf16>
    %cst_55 = arith.constant dense<0.000000e+00> : vector<16x128xf32>
    %158 = tpu.matmul %155, %157, %cst_55 {dimension_numbers = #tpu.dot_dimension_numbers<[1], [0], [0], [1], [0, 0, 1, 1], [], []>} : vector<16x256xbf16>, vector<256x128xbf16>, vector<16x128xf32> -> vector<16x128xf32>
    %c0_56 = arith.constant 0 : index
    %c0_57 = arith.constant 0 : index
    %c0_58 = arith.constant 0 : index
    %159 = vector.load %arg13[%c0_56, %c0_57, %c0_58] : memref<1x1x128xf32, #tpu.memory_space<vmem>>, vector<1x1x128xf32>
    %160 = vector.shape_cast %159 : vector<1x1x128xf32> to vector<1x128xf32>
    %161 = vector.broadcast %160 : vector<1x128xf32> to vector<16x128xf32>
    %162 = arith.addf %158, %161 : vector<16x128xf32>
    %163 = arith.addf %112, %162 : vector<16x128xf32>
    %c0_59 = arith.constant 0 : index
    %c0_60 = arith.constant 0 : index
    %164 = vector.load %arg16[%c0_59, %c0_60] : memref<16x128xf32, #tpu.memory_space<vmem>>, vector<16x128xf32>
    tpu.vector_store %arg16[%c0_59, %c0_60], %163 {strides = array<i32>} : memref<16x128xf32, #tpu.memory_space<vmem>>, vector<16x128xf32>,
    %c1_i32 = arith.constant 1 : i32
    %165 = arith.cmpi eq, %arg0, %c1_i32 : i32
    %166 = arith.extui %165 : i1 to i32
    %c0_i32_61 = arith.constant 0 : i32
    %167 = arith.cmpi ne, %166, %c0_i32_61 : i32
    scf.if %167 {
      %c0_62 = arith.constant 0 : index
      %c0_63 = arith.constant 0 : index
      %168 = vector.load %arg14[%c0_62, %c0_63] : memref<1x128xf32, #tpu.memory_space<vmem>>, vector<1x128xf32>
      %c0_64 = arith.constant 0 : index
      %c0_65 = arith.constant 0 : index
      %169 = vector.load %arg15[%c0_64, %c0_65] : memref<1x128xf32, #tpu.memory_space<vmem>>, vector<1x128xf32>
      %cst_66 = arith.constant dense<0.000000e+00> : vector<16xf32>
      %170 = vector.multi_reduction <add>, %163, %cst_66 [1] : vector<16x128xf32> to vector<16xf32>
      %171 = vector.shape_cast %170 : vector<16xf32> to vector<16x1xf32>
      %cst_67 = arith.constant 1.280000e+02 : f32
      %172 = vector.broadcast %cst_67 : f32 to vector<16x1xf32>
      %173 = arith.divf %171, %172 : vector<16x1xf32>
      %174 = vector.broadcast %173 : vector<16x1xf32> to vector<16x128xf32>
      %175 = arith.subf %163, %174 : vector<16x128xf32>
      %176 = arith.mulf %175, %175 : vector<16x128xf32>
      %cst_68 = arith.constant dense<0.000000e+00> : vector<16xf32>
      %177 = vector.multi_reduction <add>, %176, %cst_68 [1] : vector<16x128xf32> to vector<16xf32>
      %178 = vector.shape_cast %177 : vector<16xf32> to vector<16x1xf32>
      %cst_69 = arith.constant 1.280000e+02 : f32
      %179 = vector.broadcast %cst_69 : f32 to vector<16x1xf32>
      %180 = arith.divf %178, %179 : vector<16x1xf32>
      %181 = vector.broadcast %173 : vector<16x1xf32> to vector<16x128xf32>
      %182 = arith.subf %163, %181 : vector<16x128xf32>
      %cst_70 = arith.constant 9.99999974E-6 : f32
      %183 = vector.broadcast %cst_70 : f32 to vector<16x1xf32>
      %184 = arith.addf %180, %183 : vector<16x1xf32>
      %185 = math.rsqrt %184 : vector<16x1xf32>
      %186 = vector.broadcast %185 : vector<16x1xf32> to vector<16x128xf32>
      %187 = arith.mulf %182, %186 : vector<16x128xf32>
      %188 = vector.broadcast %168 : vector<1x128xf32> to vector<16x128xf32>
      %189 = arith.mulf %187, %188 : vector<16x128xf32>
      %190 = vector.broadcast %169 : vector<1x128xf32> to vector<16x128xf32>
      %191 = arith.addf %189, %190 : vector<16x128xf32>
      %c0_71 = arith.constant 0 : index
      %c0_72 = arith.constant 0 : index
      %192 = vector.load %arg16[%c0_71, %c0_72] : memref<16x128xf32, #tpu.memory_space<vmem>>, vector<16x128xf32>
      tpu.vector_store %arg16[%c0_71, %c0_72], %191 {strides = array<i32>} : memref<16x128xf32, #tpu.memory_space<vmem>>, vector<16x128xf32>,
    } else {
    }
    return
  }
  func.func @transform_1(%arg0: i32) -> (i32, i32, i32) {
    %c0_i32 = arith.constant 0 : i32
    %c0_i32_0 = arith.constant 0 : i32
    %c0_i32_1 = arith.constant 0 : i32
    return %arg0, %c0_i32, %c0_i32_0 : i32, i32, i32
  }
  func.func @transform_2(%arg0: i32) -> (i32, i32, i32) {
    %c0_i32 = arith.constant 0 : i32
    %c0_i32_0 = arith.constant 0 : i32
    %c0_i32_1 = arith.constant 0 : i32
    return %arg0, %c0_i32, %c0_i32_0 : i32, i32, i32
  }
  func.func @transform_3(%arg0: i32) -> (i32, i32, i32) {
    %c0_i32 = arith.constant 0 : i32
    %c0_i32_0 = arith.constant 0 : i32
    %c0_i32_1 = arith.constant 0 : i32
    return %arg0, %c0_i32, %c0_i32_0 : i32, i32, i32
  }
  func.func @transform_4(%arg0: i32) -> (i32, i32, i32) {
    %c0_i32 = arith.constant 0 : i32
    %c0_i32_0 = arith.constant 0 : i32
    %c0_i32_1 = arith.constant 0 : i32
    return %arg0, %c0_i32, %c0_i32_0 : i32, i32, i32
  }
  func.func @transform_5(%arg0: i32) -> (i32, i32, i32) {
    %c0_i32 = arith.constant 0 : i32
    %c0_i32_0 = arith.constant 0 : i32
    %c0_i32_1 = arith.constant 0 : i32
    return %arg0, %c0_i32, %c0_i32_0 : i32, i32, i32
  }
  func.func @transform_6(%arg0: i32) -> (i32, i32, i32) {
    %c0_i32 = arith.constant 0 : i32
    %c0_i32_0 = arith.constant 0 : i32
    %c0_i32_1 = arith.constant 0 : i32
    return %arg0, %c0_i32, %c0_i32_0 : i32, i32, i32
  }
  func.func @transform_7(%arg0: i32) -> (i32, i32, i32) {
    %c0_i32 = arith.constant 0 : i32
    %c0_i32_0 = arith.constant 0 : i32
    %c0_i32_1 = arith.constant 0 : i32
    return %arg0, %c0_i32, %c0_i32_0 : i32, i32, i32
  }
  func.func @transform_8(%arg0: i32) -> (i32, i32, i32) {
    %c0_i32 = arith.constant 0 : i32
    %c0_i32_0 = arith.constant 0 : i32
    %c0_i32_1 = arith.constant 0 : i32
    return %arg0, %c0_i32, %c0_i32_0 : i32, i32, i32
  }
  func.func @transform_9(%arg0: i32) -> (i32, i32, i32) {
    %c0_i32 = arith.constant 0 : i32
    %c0_i32_0 = arith.constant 0 : i32
    %c0_i32_1 = arith.constant 0 : i32
    return %arg0, %c0_i32, %c0_i32_0 : i32, i32, i32
  }
  func.func @transform_10(%arg0: i32) -> (i32, i32, i32) {
    %c0_i32 = arith.constant 0 : i32
    %c0_i32_0 = arith.constant 0 : i32
    %c0_i32_1 = arith.constant 0 : i32
    return %arg0, %c0_i32, %c0_i32_0 : i32, i32, i32
  }
  func.func @transform_11(%arg0: i32) -> (i32, i32, i32) {
    %c0_i32 = arith.constant 0 : i32
    %c0_i32_0 = arith.constant 0 : i32
    %c0_i32_1 = arith.constant 0 : i32
    return %arg0, %c0_i32, %c0_i32_0 : i32, i32, i32
  }
  func.func @transform_12(%arg0: i32) -> (i32, i32, i32) {
    %c0_i32 = arith.constant 0 : i32
    %c0_i32_0 = arith.constant 0 : i32
    %c0_i32_1 = arith.constant 0 : i32
    return %arg0, %c0_i32, %c0_i32_0 : i32, i32, i32
  }
  func.func @transform_13(%arg0: i32) -> (i32, i32) {
    %c0_i32 = arith.constant 0 : i32
    %c0_i32_0 = arith.constant 0 : i32
    %c0_i32_1 = arith.constant 0 : i32
    return %c0_i32, %c0_i32_0 : i32, i32
  }
  func.func @transform_14(%arg0: i32) -> (i32, i32) {
    %c0_i32 = arith.constant 0 : i32
    %c0_i32_0 = arith.constant 0 : i32
    %c0_i32_1 = arith.constant 0 : i32
    return %c0_i32, %c0_i32_0 : i32, i32
  }
  func.func @transform_15(%arg0: i32) -> (i32, i32) {
    %c0_i32 = arith.constant 0 : i32
    %c0_i32_0 = arith.constant 0 : i32
    %c0_i32_1 = arith.constant 0 : i32
    return %c0_i32, %c0_i32_0 : i32, i32
  }
}

</mosaic_0001>

<llo_original>
// kernel: tpu_custom_call.1
$region0: #{tpu_custom_call.1}
  #allocation0 [shape = 'u32[]', space=smem, size = 0x4, offset = 0x4, fixed_abs, tag = 'smem constant byte address 0x4 - core index']
  #allocation1 [shape = 'u32[144,128]{1,0:T(1,128)}', space=vmem, size = 0x12000, scoped, tag = 'internal scratch']
  #allocation2 [shape = 'f32[8,8]{1,0:T(8,128)}', space=vmem, size = 0x1000, scoped, tag = 'scratch operand']
  #allocation3 [shape = 's32[1]{0}', space=sflag, size = 0x4, scoped, tag = 'scratch operand']
  #allocation16 [shape = 's32[]', space=sflag, size = 0x4, offset = 0, fixed_abs, tag = 'sflag constant byte address 0x0 - dummy sync flag']
  #allocation17 [shape = 's32[]', space=sflag, size = 0x4, offset = 0, fixed_abs, tag = 'sflag constant byte address 0x0 - dummy sync flag']
  #allocation18 [shape = 'u32[]', space=smem, size = 0x4, offset = 0x44, fixed_abs, tag = 'smem constant byte address 0x44 - assertion arg 0']
  #allocation19 [shape = 'u32[]', space=smem, size = 0x4, offset = 0x48, fixed_abs, tag = 'smem constant byte address 0x48 - assertion arg 1']
  %s0 = inlined_call_operand.hbm [shape: f32[16,128], index: 0, kind: input, shape index: {}]
  %s1 = inlined_call_operand.hbm [shape: f32[2,1,128], index: 1, kind: input, shape index: {}]
  %s2 = inlined_call_operand.hbm [shape: f32[2,1,128], index: 2, kind: input, shape index: {}]
  %s3 = inlined_call_operand.hbm [shape: bf16[2,128,384], index: 3, kind: input, shape index: {}]
  %s4 = inlined_call_operand.vmem [shape: f32[2,1,384], index: 4, kind: input, shape index: {}]
  %s5 = inlined_call_operand.hbm [shape: bf16[2,128,128], index: 5, kind: input, shape index: {}]
  %s6 = inlined_call_operand.vmem [shape: f32[2,1,128], index: 6, kind: input, shape index: {}]
  %s7 = inlined_call_operand.vmem [shape: f32[2,1,128], index: 7, kind: input, shape index: {}]
  %s8 = inlined_call_operand.vmem [shape: f32[2,1,128], index: 8, kind: input, shape index: {}]
  %s9 = inlined_call_operand.hbm [shape: bf16[2,128,256], index: 9, kind: input, shape index: {}]
  %s10 = inlined_call_operand.vmem [shape: f32[2,1,256], index: 10, kind: input, shape index: {}]
  %s11 = inlined_call_operand.hbm [shape: bf16[2,256,128], index: 11, kind: input, shape index: {}]
  %s12 = inlined_call_operand.vmem [shape: f32[2,1,128], index: 12, kind: input, shape index: {}]
  %s13 = inlined_call_operand.vmem [shape: f32[1,128], index: 13, kind: input, shape index: {}]
  %s14 = inlined_call_operand.vmem [shape: f32[1,128], index: 14, kind: input, shape index: {}]
  %s15 = inlined_call_operand.hbm [shape: f32[16,128], index: 15, kind: output, shape index: {}]
  %s16 = sld [smem:[#allocation0]]
  $region125: #{tpu_custom_call.1} parent=0
    _
  %s18 = ssub.s32 1, %s16
  %s19 = scalar_select 0, %s18, %s16
  $region1: #{tpu_custom_call.1} parent=0
    #allocation4 [shape = 'u8[1024]{0}', space=vmem, size = 0x400, scoped, tag = 'input window, operand 1']
    #allocation5 [shape = 's32[2]{0}', space=sflag, size = 0x8, scoped, tag = 'scoped memory for tpu_custom_call.1']
    #allocation6 [shape = 's32[2]{0}', space=sflag, size = 0x8, scoped, tag = 'scoped memory for tpu_custom_call.1']
    #allocation7 [shape = 'u8[1024]{0}', space=vmem, size = 0x400, scoped, tag = 'input window, operand 2']
    #allocation8 [shape = 's32[2]{0}', space=sflag, size = 0x8, scoped, tag = 'scoped memory for tpu_custom_call.1']
    #allocation9 [shape = 'u8[196608]{0}', space=vmem, size = 0x30000, scoped, tag = 'input window, operand 3']
    #allocation10 [shape = 'u8[65536]{0}', space=vmem, size = 0x10000, scoped, tag = 'input window, operand 5']
    #allocation11 [shape = 's32[2]{0}', space=sflag, size = 0x8, scoped, tag = 'scoped memory for tpu_custom_call.1']
    #allocation12 [shape = 'u8[131072]{0}', space=vmem, size = 0x20000, scoped, tag = 'input window, operand 9']
    #allocation13 [shape = 'u8[131072]{0}', space=vmem, size = 0x20000, scoped, tag = 'input window, operand 11']
    #allocation14 [shape = 's32[2]{0}', space=sflag, size = 0x8, scoped, tag = 'scoped memory for tpu_custom_call.1']
    #allocation15 [shape = 'u8[8192]{0}', space=vmem, size = 0x2000, scoped, tag = 'output window, operand 0, single buffered']
    %20 = vsyncpa [#allocation5], 0
    %s21 = scalar_lea.sflag [#allocation5], 1
    %22 = vsyncpa %s21, 0
    %23 = vsyncpa [#allocation8], 0
    %s24 = scalar_lea.sflag [#allocation8], 1
    %25 = vsyncpa %s24, 0
    %26 = vsyncpa [#allocation11], 0
    %s27 = scalar_lea.sflag [#allocation11], 1
    %28 = vsyncpa %s27, 0
    %29 = vsyncpa [#allocation14], 0
    %s30 = scalar_lea.sflag [#allocation14], 1
    %31 = vsyncpa %s30, 0
    %32 = vsyncpa [#allocation6], 0
    loop: start=0, step=1, limit=4
    $region2: #{tpu_custom_call.1} parent=1 // loop_pre_header
      _
    $region3: #{tpu_custom_call.1} parent=1 // loop_header
      %s34 = sphi 0, %s38
      %p35 = scmp.ge.s32.totalorder %s34, 4
      %s44 = sphi 0, %s46
      %s47 = sphi 0, %s44
      %s48 = sphi 0, %s47
      %s64 = sphi 0, %s48
      %s70 = sphi 0, %s72
      %s73 = sphi 0, %s70
      %s74 = sphi 0, %s73
      %s90 = sphi 0, %s74
      %s96 = sphi 0, %s98
      %s99 = sphi 0, %s96
      %s100 = sphi 0, %s99
      %s116 = sphi 0, %s100
      %s122 = sphi 0, %s124
      %s125 = sphi 0, %s122
      %s126 = sphi 0, %s125
      %s142 = sphi 0, %s126
      %s148 = sphi 0, %s150
      %s151 = sphi 0, %s148
      %s152 = sphi 0, %s151
      %s168 = sphi 0, %s152
      %s174 = sphi 0, %s176
      %s177 = sphi 0, %s174
      %s178 = sphi 0, %s177
      %s194 = sphi 0, %s178
      %s200 = sphi 0, %s202
      %s203 = sphi 0, %s200
      %s204 = sphi 0, %s203
      %s220 = sphi 0, %s204
      %s226 = sphi 0, %s228
      %s229 = sphi 0, %s226
      %s230 = sphi 0, %s229
      %s246 = sphi 0, %s230
      %s252 = sphi 0, %s254
      %s255 = sphi 0, %s252
      %s256 = sphi 0, %s255
      %s272 = sphi 0, %s256
      %s278 = sphi 0, %s280
      %s281 = sphi 0, %s278
      %s282 = sphi 0, %s281
      %s298 = sphi 0, %s282
      %s304 = sphi 0, %s306
      %s307 = sphi 0, %s304
      %s308 = sphi 0, %s307
      %s324 = sphi 0, %s308
      %s330 = sphi 0, %s332
      %s333 = sphi 0, %s330
      %s334 = sphi 0, %s333
      %s350 = sphi 0, %s334
      %s354 = sphi 0, %s354
      %s356 = sphi 0, %s354
      %s357 = sphi 0, %s356
      %s371 = sphi 0, %s357
      %s375 = sphi 0, %s375
      %s377 = sphi 0, %s375
      %s378 = sphi 0, %s377
      %s392 = sphi 0, %s378
      %s396 = sphi 0, %s396
      %s398 = sphi 0, %s396
      %s399 = sphi 0, %s398
      %s413 = sphi 0, %s399
    $region4: #{tpu_custom_call.1} parent=1 // loop_header_branch
      %37 = sbr.rel (%p35) target = $region8
    $region5: #{tpu_custom_call.1} parent=1 // loop_body
      %s39 = ssub.s32 %s34, 1
      %s40 = ssub.s32 %s34, 2
      %s41 = sadd.s32 %s34, 1
      %s42 = ssub.s32 %s34, %s41
      %p43 = scmp.eq.s32.totalorder %s42, 0
      %s45 = sadd.s32 %s44, 1
      %s46 = scalar_select %p43, %s44, %s45
      %p49 = pneg %p43
      %p50 = scmp.eq.s32.totalorder %s34, 1
      %p51 = por %p49, %p50
      %p52 = scmp.ne.s32.totalorder %s44, %s47
      %p53 = scmp.eq.s32.totalorder %s34, 0
      %p54 = por %p52, %p53
      %p55 = scmp.ne.s32.totalorder %s44, %s47
      %p56 = scmp.eq.s32.totalorder %s39, 1
      %p57 = por %p55, %p56
      %p58 = scmp.ne.s32.totalorder %s47, %s48
      %p59 = scmp.eq.s32.totalorder %s39, 0
      %p60 = por %p58, %p59
      %p61 = scmp.ne.s32.totalorder %s47, %s48
      %p62 = scmp.eq.s32.totalorder %s40, 1
      %p63 = por %p61, %p62
      %p65 = scmp.ne.s32.totalorder %s48, %s64
      %p66 = scmp.eq.s32.totalorder %s40, 0
      %p67 = por %p65, %p66
      %s68 = ssub.s32 %s34, %s41
      %p69 = scmp.eq.s32.totalorder %s68, 0
      %s71 = sadd.s32 %s70, 1
      %s72 = scalar_select %p69, %s70, %s71
      %p75 = pneg %p69
      %p76 = scmp.eq.s32.totalorder %s34, 1
      %p77 = por %p75, %p76
      %p78 = scmp.ne.s32.totalorder %s70, %s73
      %p79 = scmp.eq.s32.totalorder %s34, 0
      %p80 = por %p78, %p79
      %p81 = scmp.ne.s32.totalorder %s70, %s73
      %p82 = scmp.eq.s32.totalorder %s39, 1
      %p83 = por %p81, %p82
      %p84 = scmp.ne.s32.totalorder %s73, %s74
      %p85 = scmp.eq.s32.totalorder %s39, 0
      %p86 = por %p84, %p85
      %p87 = scmp.ne.s32.totalorder %s73, %s74
      %p88 = scmp.eq.s32.totalorder %s40, 1
      %p89 = por %p87, %p88
      %p91 = scmp.ne.s32.totalorder %s74, %s90
      %p92 = scmp.eq.s32.totalorder %s40, 0
      %p93 = por %p91, %p92
      %s94 = ssub.s32 %s34, %s41
      %p95 = scmp.eq.s32.totalorder %s94, 0
      %s97 = sadd.s32 %s96, 1
      %s98 = scalar_select %p95, %s96, %s97
      %p101 = pneg %p95
      %p102 = scmp.eq.s32.totalorder %s34, 1
      %p103 = por %p101, %p102
      %p104 = scmp.ne.s32.totalorder %s96, %s99
      %p105 = scmp.eq.s32.totalorder %s34, 0
      %p106 = por %p104, %p105
      %p107 = scmp.ne.s32.totalorder %s96, %s99
      %p108 = scmp.eq.s32.totalorder %s39, 1
      %p109 = por %p107, %p108
      %p110 = scmp.ne.s32.totalorder %s99, %s100
      %p111 = scmp.eq.s32.totalorder %s39, 0
      %p112 = por %p110, %p111
      %p113 = scmp.ne.s32.totalorder %s99, %s100
      %p114 = scmp.eq.s32.totalorder %s40, 1
      %p115 = por %p113, %p114
      %p117 = scmp.ne.s32.totalorder %s100, %s116
      %p118 = scmp.eq.s32.totalorder %s40, 0
      %p119 = por %p117, %p118
      %s120 = ssub.s32 %s34, %s41
      %p121 = scmp.eq.s32.totalorder %s120, 0
      %s123 = sadd.s32 %s122, 1
      %s124 = scalar_select %p121, %s122, %s123
      %p127 = pneg %p121
      %p128 = scmp.eq.s32.totalorder %s34, 1
      %p129 = por %p127, %p128
      %p130 = scmp.ne.s32.totalorder %s122, %s125
      %p131 = scmp.eq.s32.totalorder %s34, 0
      %p132 = por %p130, %p131
      %p133 = scmp.ne.s32.totalorder %s122, %s125
      %p134 = scmp.eq.s32.totalorder %s39, 1
      %p135 = por %p133, %p134
      %p136 = scmp.ne.s32.totalorder %s125, %s126
      %p137 = scmp.eq.s32.totalorder %s39, 0
      %p138 = por %p136, %p137
      %p139 = scmp.ne.s32.totalorder %s125, %s126
      %p140 = scmp.eq.s32.totalorder %s40, 1
      %p141 = por %p139, %p140
      %p143 = scmp.ne.s32.totalorder %s126, %s142
      %p144 = scmp.eq.s32.totalorder %s40, 0
      %p145 = por %p143, %p144
      %s146 = ssub.s32 %s34, %s41
      %p147 = scmp.eq.s32.totalorder %s146, 0
      %s149 = sadd.s32 %s148, 1
      %s150 = scalar_select %p147, %s148, %s149
      %p153 = pneg %p147
      %p154 = scmp.eq.s32.totalorder %s34, 1
      %p155 = por %p153, %p154
      %p156 = scmp.ne.s32.totalorder %s148, %s151
      %p157 = scmp.eq.s32.totalorder %s34, 0
      %p158 = por %p156, %p157
      %p159 = scmp.ne.s32.totalorder %s148, %s151
      %p160 = scmp.eq.s32.totalorder %s39, 1
      %p161 = por %p159, %p160
      %p162 = scmp.ne.s32.totalorder %s151, %s152
      %p163 = scmp.eq.s32.totalorder %s39, 0
      %p164 = por %p162, %p163
      %p165 = scmp.ne.s32.totalorder %s151, %s152
      %p166 = scmp.eq.s32.totalorder %s40, 1
      %p167 = por %p165, %p166
      %p169 = scmp.ne.s32.totalorder %s152, %s168
      %p170 = scmp.eq.s32.totalorder %s40, 0
      %p171 = por %p169, %p170
      %s172 = ssub.s32 %s34, %s41
      %p173 = scmp.eq.s32.totalorder %s172, 0
      %s175 = sadd.s32 %s174, 1
      %s176 = scalar_select %p173, %s174, %s175
      %p179 = pneg %p173
      %p180 = scmp.eq.s32.totalorder %s34, 1
      %p181 = por %p179, %p180
      %p182 = scmp.ne.s32.totalorder %s174, %s177
      %p183 = scmp.eq.s32.totalorder %s34, 0
      %p184 = por %p182, %p183
      %p185 = scmp.ne.s32.totalorder %s174, %s177
      %p186 = scmp.eq.s32.totalorder %s39, 1
      %p187 = por %p185, %p186
      %p188 = scmp.ne.s32.totalorder %s177, %s178
      %p189 = scmp.eq.s32.totalorder %s39, 0
      %p190 = por %p188, %p189
      %p191 = scmp.ne.s32.totalorder %s177, %s178
      %p192 = scmp.eq.s32.totalorder %s40, 1
      %p193 = por %p191, %p192
      %p195 = scmp.ne.s32.totalorder %s178, %s194
      %p196 = scmp.eq.s32.totalorder %s40, 0
      %p197 = por %p195, %p196
      %s198 = ssub.s32 %s34, %s41
      %p199 = scmp.eq.s32.totalorder %s198, 0
      %s201 = sadd.s32 %s200, 1
      %s202 = scalar_select %p199, %s200, %s201
      %p205 = pneg %p199
      %p206 = scmp.eq.s32.totalorder %s34, 1
      %p207 = por %p205, %p206
      %p208 = scmp.ne.s32.totalorder %s200, %s203
      %p209 = scmp.eq.s32.totalorder %s34, 0
      %p210 = por %p208, %p209
      %p211 = scmp.ne.s32.totalorder %s200, %s203
      %p212 = scmp.eq.s32.totalorder %s39, 1
      %p213 = por %p211, %p212
      %p214 = scmp.ne.s32.totalorder %s203, %s204
      %p215 = scmp.eq.s32.totalorder %s39, 0
      %p216 = por %p214, %p215
      %p217 = scmp.ne.s32.totalorder %s203, %s204
      %p218 = scmp.eq.s32.totalorder %s40, 1
      %p219 = por %p217, %p218
      %p221 = scmp.ne.s32.totalorder %s204, %s220
      %p222 = scmp.eq.s32.totalorder %s40, 0
      %p223 = por %p221, %p222
      %s224 = ssub.s32 %s34, %s41
      %p225 = scmp.eq.s32.totalorder %s224, 0
      %s227 = sadd.s32 %s226, 1
      %s228 = scalar_select %p225, %s226, %s227
      %p231 = pneg %p225
      %p232 = scmp.eq.s32.totalorder %s34, 1
      %p233 = por %p231, %p232
      %p234 = scmp.ne.s32.totalorder %s226, %s229
      %p235 = scmp.eq.s32.totalorder %s34, 0
      %p236 = por %p234, %p235
      %p237 = scmp.ne.s32.totalorder %s226, %s229
      %p238 = scmp.eq.s32.totalorder %s39, 1
      %p239 = por %p237, %p238
      %p240 = scmp.ne.s32.totalorder %s229, %s230
      %p241 = scmp.eq.s32.totalorder %s39, 0
      %p242 = por %p240, %p241
      %p243 = scmp.ne.s32.totalorder %s229, %s230
      %p244 = scmp.eq.s32.totalorder %s40, 1
      %p245 = por %p243, %p244
      %p247 = scmp.ne.s32.totalorder %s230, %s246
      %p248 = scmp.eq.s32.totalorder %s40, 0
      %p249 = por %p247, %p248
      %s250 = ssub.s32 %s34, %s41
      %p251 = scmp.eq.s32.totalorder %s250, 0
      %s253 = sadd.s32 %s252, 1
      %s254 = scalar_select %p251, %s252, %s253
      %p257 = pneg %p251
      %p258 = scmp.eq.s32.totalorder %s34, 1
      %p259 = por %p257, %p258
      %p260 = scmp.ne.s32.totalorder %s252, %s255
      %p261 = scmp.eq.s32.totalorder %s34, 0
      %p262 = por %p260, %p261
      %p263 = scmp.ne.s32.totalorder %s252, %s255
      %p264 = scmp.eq.s32.totalorder %s39, 1
      %p265 = por %p263, %p264
      %p266 = scmp.ne.s32.totalorder %s255, %s256
      %p267 = scmp.eq.s32.totalorder %s39, 0
      %p268 = por %p266, %p267
      %p269 = scmp.ne.s32.totalorder %s255, %s256
      %p270 = scmp.eq.s32.totalorder %s40, 1
      %p271 = por %p269, %p270
      %p273 = scmp.ne.s32.totalorder %s256, %s272
      %p274 = scmp.eq.s32.totalorder %s40, 0
      %p275 = por %p273, %p274
      %s276 = ssub.s32 %s34, %s41
      %p277 = scmp.eq.s32.totalorder %s276, 0
      %s279 = sadd.s32 %s278, 1
      %s280 = scalar_select %p277, %s278, %s279
      %p283 = pneg %p277
      %p284 = scmp.eq.s32.totalorder %s34, 1
      %p285 = por %p283, %p284
      %p286 = scmp.ne.s32.totalorder %s278, %s281
      %p287 = scmp.eq.s32.totalorder %s34, 0
      %p288 = por %p286, %p287
      %p289 = scmp.ne.s32.totalorder %s278, %s281
      %p290 = scmp.eq.s32.totalorder %s39, 1
      %p291 = por %p289, %p290
      %p292 = scmp.ne.s32.totalorder %s281, %s282
      %p293 = scmp.eq.s32.totalorder %s39, 0
      %p294 = por %p292, %p293
      %p295 = scmp.ne.s32.totalorder %s281, %s282
      %p296 = scmp.eq.s32.totalorder %s40, 1
      %p297 = por %p295, %p296
      %p299 = scmp.ne.s32.totalorder %s282, %s298
      %p300 = scmp.eq.s32.totalorder %s40, 0
      %p301 = por %p299, %p300
      %s302 = ssub.s32 %s34, %s41
      %p303 = scmp.eq.s32.totalorder %s302, 0
      %s305 = sadd.s32 %s304, 1
      %s306 = scalar_select %p303, %s304, %s305
      %p309 = pneg %p303
      %p310 = scmp.eq.s32.totalorder %s34, 1
      %p311 = por %p309, %p310
      %p312 = scmp.ne.s32.totalorder %s304, %s307
      %p313 = scmp.eq.s32.totalorder %s34, 0
      %p314 = por %p312, %p313
      %p315 = scmp.ne.s32.totalorder %s304, %s307
      %p316 = scmp.eq.s32.totalorder %s39, 1
      %p317 = por %p315, %p316
      %p318 = scmp.ne.s32.totalorder %s307, %s308
      %p319 = scmp.eq.s32.totalorder %s39, 0
      %p320 = por %p318, %p319
      %p321 = scmp.ne.s32.totalorder %s307, %s308
      %p322 = scmp.eq.s32.totalorder %s40, 1
      %p323 = por %p321, %p322
      %p325 = scmp.ne.s32.totalorder %s308, %s324
      %p326 = scmp.eq.s32.totalorder %s40, 0
      %p327 = por %p325, %p326
      %s328 = ssub.s32 %s34, %s41
      %p329 = scmp.eq.s32.totalorder %s328, 0
      %s331 = sadd.s32 %s330, 1
      %s332 = scalar_select %p329, %s330, %s331
      %p335 = pneg %p329
      %p336 = scmp.eq.s32.totalorder %s34, 1
      %p337 = por %p335, %p336
      %p338 = scmp.ne.s32.totalorder %s330, %s333
      %p339 = scmp.eq.s32.totalorder %s34, 0
      %p340 = por %p338, %p339
      %p341 = scmp.ne.s32.totalorder %s330, %s333
      %p342 = scmp.eq.s32.totalorder %s39, 1
      %p343 = por %p341, %p342
      %p344 = scmp.ne.s32.totalorder %s333, %s334
      %p345 = scmp.eq.s32.totalorder %s39, 0
      %p346 = por %p344, %p345
      %p347 = scmp.ne.s32.totalorder %s333, %s334
      %p348 = scmp.eq.s32.totalorder %s40, 1
      %p349 = por %p347, %p348
      %p351 = scmp.ne.s32.totalorder %s334, %s350
      %p352 = scmp.eq.s32.totalorder %s40, 0
      %p353 = por %p351, %p352
      %s355 = sadd.s32 %s354, 1
      %p358 = scmp.eq.s32.totalorder %s34, 1
      %p359 = scmp.ne.s32.totalorder %s354, %s356
      %p360 = scmp.eq.s32.totalorder %s34, 0
      %p361 = por %p359, %p360
      %p362 = scmp.ne.s32.totalorder %s354, %s356
      %p363 = scmp.eq.s32.totalorder %s39, 1
      %p364 = por %p362, %p363
      %p365 = scmp.ne.s32.totalorder %s356, %s357
      %p366 = scmp.eq.s32.totalorder %s39, 0
      %p367 = por %p365, %p366
      %p368 = scmp.ne.s32.totalorder %s356, %s357
      %p369 = scmp.eq.s32.totalorder %s40, 1
      %p370 = por %p368, %p369
      %p372 = scmp.ne.s32.totalorder %s357, %s371
      %p373 = scmp.eq.s32.totalorder %s40, 0
      %p374 = por %p372, %p373
      %s376 = sadd.s32 %s375, 1
      %p379 = scmp.eq.s32.totalorder %s34, 1
      %p380 = scmp.ne.s32.totalorder %s375, %s377
      %p381 = scmp.eq.s32.totalorder %s34, 0
      %p382 = por %p380, %p381
      %p383 = scmp.ne.s32.totalorder %s375, %s377
      %p384 = scmp.eq.s32.totalorder %s39, 1
      %p385 = por %p383, %p384
      %p386 = scmp.ne.s32.totalorder %s377, %s378
      %p387 = scmp.eq.s32.totalorder %s39, 0
      %p388 = por %p386, %p387
      %p389 = scmp.ne.s32.totalorder %s377, %s378
      %p390 = scmp.eq.s32.totalorder %s40, 1
      %p391 = por %p389, %p390
      %p393 = scmp.ne.s32.totalorder %s378, %s392
      %p394 = scmp.eq.s32.totalorder %s40, 0
      %p395 = por %p393, %p394
      %s397 = sadd.s32 %s396, 1
      %p400 = scmp.eq.s32.totalorder %s34, 1
      %p401 = scmp.ne.s32.totalorder %s396, %s398
      %p402 = scmp.eq.s32.totalorder %s34, 0
      %p403 = por %p401, %p402
      %p404 = scmp.ne.s32.totalorder %s396, %s398
      %p405 = scmp.eq.s32.totalorder %s39, 1
      %p406 = por %p404, %p405
      %p407 = scmp.ne.s32.totalorder %s398, %s399
      %p408 = scmp.eq.s32.totalorder %s39, 0
      %p409 = por %p407, %p408
      %p410 = scmp.ne.s32.totalorder %s398, %s399
      %p411 = scmp.eq.s32.totalorder %s40, 1
      %p412 = por %p410, %p411
      %p414 = scmp.ne.s32.totalorder %s399, %s413
      %p415 = scmp.eq.s32.totalorder %s40, 0
      %p416 = por %p414, %p415
      %p417 = scmp.le.s32.totalorder 1, %s34
      %p418 = scmp.lt.s32.totalorder %s34, 3
      %p419 = pnand %p417, %p418
      %p420 = pneg %p419
      // Predicated region
      $region9: #{tpu_custom_call.1} parent=5 // pred_check
        _
      $region10: #{tpu_custom_call.1} parent=5 // pred_check_branch
        %422 = sbr.rel (%p419) target = $region12
      $region11: #{tpu_custom_call.1} parent=5 // pred_region
        %s423 = ssub.s32 %s34, 1
        // Predicated region
        $region13: #{tpu_custom_call.1} parent=11 // pred_check
          %p424 = pneg %p367
        $region14: #{tpu_custom_call.1} parent=11 // pred_check_branch
          %426 = sbr.rel (%p424) target = $region16
        $region15: #{tpu_custom_call.1} parent=11 // pred_region
          _
        $region16: #{tpu_custom_call.1} parent=11 // pred_fallthru
          _
        // Predicated region
        $region17: #{tpu_custom_call.1} parent=11 // pred_check
          %p427 = pneg %p388
        $region18: #{tpu_custom_call.1} parent=11 // pred_check_branch
          %429 = sbr.rel (%p427) target = $region20
        $region19: #{tpu_custom_call.1} parent=11 // pred_region
          _
        $region20: #{tpu_custom_call.1} parent=11 // pred_fallthru
          _
      $region12: #{tpu_custom_call.1} parent=5 // pred_fallthru
        _
      %p430 = scmp.lt.s32.totalorder %s34, 2
      // Predicated region
      $region21: #{tpu_custom_call.1} parent=5 // pred_check
        %p431 = pneg %p430
      $region22: #{tpu_custom_call.1} parent=5 // pred_check_branch
        %433 = sbr.rel (%p431) target = $region24
      $region23: #{tpu_custom_call.1} parent=5 // pred_region
        // Predicated region
        $region25: #{tpu_custom_call.1} parent=23 // pred_check
          %p434 = pneg %p54
        $region26: #{tpu_custom_call.1} parent=23 // pred_check_branch
          %436 = sbr.rel (%p434) target = $region28
        $region27: #{tpu_custom_call.1} parent=23 // pred_region
          %s437 = sand.u32 %s44, 1
          %s438 = scalar_lea.sflag [#allocation5], %s437
          %s439 = sand.u32 %s44, 1
          %s440 = scalar_lea.vmem [#allocation4], %s439
          %s442 = ssub.s32 16, 16
          %443 = vsyncadd %s438, %s442
          %s444 = smul.addr %s34, 16
          %s445 = scalar_lea.hbm %s1, %s444
          %s447 = sshll.u32 %s440, 4
          %s448 = int_to_ptr.vmem [resolvable:$true] %s447
          %450 = dma.hbm_to_vmem [thread:$0]  %s445, 16, %s448, %s438
        $region28: #{tpu_custom_call.1} parent=23 // pred_fallthru
          _
        // Predicated region
        $region29: #{tpu_custom_call.1} parent=23 // pred_check
          %p451 = pneg %p80
        $region30: #{tpu_custom_call.1} parent=23 // pred_check_branch
          %453 = sbr.rel (%p451) target = $region32
        $region31: #{tpu_custom_call.1} parent=23 // pred_region
          %s454 = sand.u32 %s34, 1
          %s455 = scalar_lea.sflag [#allocation8], %s454
          %s456 = sand.u32 %s70, 1
          %s457 = scalar_lea.vmem [#allocation7], %s456
          %s459 = ssub.s32 16, 16
          %460 = vsyncadd %s455, %s459
          %s461 = smul.addr %s34, 16
          %s462 = scalar_lea.hbm %s2, %s461
          %s464 = sshll.u32 %s457, 4
          %s465 = int_to_ptr.vmem [resolvable:$true] %s464
          %467 = dma.hbm_to_vmem [thread:$0]  %s462, 16, %s465, %s455
        $region32: #{tpu_custom_call.1} parent=23 // pred_fallthru
          _
        // Predicated region
        $region33: #{tpu_custom_call.1} parent=23 // pred_check
          %p468 = pneg %p106
        $region34: #{tpu_custom_call.1} parent=23 // pred_check_branch
          %470 = sbr.rel (%p468) target = $region36
        $region35: #{tpu_custom_call.1} parent=23 // pred_region
          %s471 = sand.u32 %s34, 1
          %s472 = scalar_lea.sflag [#allocation8], %s471
          %s473 = sand.u32 %s96, 1
          %s474 = smul.addr %s473, 192
          %s475 = scalar_lea.vmem [#allocation9], %s474
          %s477 = ssub.s32 3072, 3072
          %478 = vsyncadd %s472, %s477
          %s479 = smul.addr %s34, 48
          %s480 = smul.addr %s479, 64
          %s481 = scalar_lea.hbm %s3, %s480
          %s482 = sshll.u32 %s475, 4
          %s483 = int_to_ptr.vmem [resolvable:$true] %s482
          %488 = dma.hbm_to_vmem [thread:$0]  %s481, 3072, %s483, %s472, 192, 192, 12
        $region36: #{tpu_custom_call.1} parent=23 // pred_fallthru
          _
        // Predicated region
        $region37: #{tpu_custom_call.1} parent=23 // pred_check
          %p489 = pneg %p132
        $region38: #{tpu_custom_call.1} parent=23 // pred_check_branch
          %491 = sbr.rel (%p489) target = $region40
        $region39: #{tpu_custom_call.1} parent=23 // pred_region
          %p492 = scmp.lt.s32.totalorder %s34, 1
          %s493 = scalar_select %p492, %s34, 1
          %s494 = smul.addr %s493, 3
          %s495 = scalar_lea.vmem %s4, %s494
        $region40: #{tpu_custom_call.1} parent=23 // pred_fallthru
          _
        // Predicated region
        $region41: #{tpu_custom_call.1} parent=23 // pred_check
          %p496 = pneg %p158
        $region42: #{tpu_custom_call.1} parent=23 // pred_check_branch
          %498 = sbr.rel (%p496) target = $region44
        $region43: #{tpu_custom_call.1} parent=23 // pred_region
          %s499 = sand.u32 %s34, 1
          %s500 = scalar_lea.sflag [#allocation11], %s499
          %s501 = sand.u32 %s148, 1
          %s502 = smul.addr %s501, 64
          %s503 = scalar_lea.vmem [#allocation10], %s502
          %s505 = ssub.s32 1024, 1024
          %506 = vsyncadd %s500, %s505
          %s507 = smul.addr %s34, 16
          %s508 = smul.addr %s507, 64
          %s509 = scalar_lea.hbm %s5, %s508
          %s510 = sshll.u32 %s503, 4
          %s511 = int_to_ptr.vmem [resolvable:$true] %s510
          %516 = dma.hbm_to_vmem [thread:$0]  %s509, 1024, %s511, %s500, 64, 64, 4
        $region44: #{tpu_custom_call.1} parent=23 // pred_fallthru
          _
        // Predicated region
        $region45: #{tpu_custom_call.1} parent=23 // pred_check
          %p517 = pneg %p184
        $region46: #{tpu_custom_call.1} parent=23 // pred_check_branch
          %519 = sbr.rel (%p517) target = $region48
        $region47: #{tpu_custom_call.1} parent=23 // pred_region
          %p520 = scmp.lt.s32.totalorder %s34, 1
          %s521 = scalar_select %p520, %s34, 1
          %s522 = scalar_lea.vmem %s6, %s521
        $region48: #{tpu_custom_call.1} parent=23 // pred_fallthru
          _
        // Predicated region
        $region49: #{tpu_custom_call.1} parent=23 // pred_check
          %p523 = pneg %p210
        $region50: #{tpu_custom_call.1} parent=23 // pred_check_branch
          %525 = sbr.rel (%p523) target = $region52
        $region51: #{tpu_custom_call.1} parent=23 // pred_region
          %p526 = scmp.lt.s32.totalorder %s34, 1
          %s527 = scalar_select %p526, %s34, 1
          %s528 = scalar_lea.vmem %s7, %s527
        $region52: #{tpu_custom_call.1} parent=23 // pred_fallthru
          _
        // Predicated region
        $region53: #{tpu_custom_call.1} parent=23 // pred_check
          %p529 = pneg %p236
        $region54: #{tpu_custom_call.1} parent=23 // pred_check_branch
          %531 = sbr.rel (%p529) target = $region56
        $region55: #{tpu_custom_call.1} parent=23 // pred_region
          %p532 = scmp.lt.s32.totalorder %s34, 1
          %s533 = scalar_select %p532, %s34, 1
          %s534 = scalar_lea.vmem %s8, %s533
        $region56: #{tpu_custom_call.1} parent=23 // pred_fallthru
          _
        // Predicated region
        $region57: #{tpu_custom_call.1} parent=23 // pred_check
          %p535 = pneg %p262
        $region58: #{tpu_custom_call.1} parent=23 // pred_check_branch
          %537 = sbr.rel (%p535) target = $region60
        $region59: #{tpu_custom_call.1} parent=23 // pred_region
          %s538 = sand.u32 %s34, 1
          %s539 = scalar_lea.sflag [#allocation11], %s538
          %s540 = sand.u32 %s252, 1
          %s541 = smul.addr %s540, 128
          %s542 = scalar_lea.vmem [#allocation12], %s541
          %s544 = ssub.s32 2048, 2048
          %545 = vsyncadd %s539, %s544
          %s546 = smul.addr %s34, 32
          %s547 = smul.addr %s546, 64
          %s548 = scalar_lea.hbm %s9, %s547
          %s549 = sshll.u32 %s542, 4
          %s550 = int_to_ptr.vmem [resolvable:$true] %s549
          %555 = dma.hbm_to_vmem [thread:$0]  %s548, 2048, %s550, %s539, 128, 128, 8
        $region60: #{tpu_custom_call.1} parent=23 // pred_fallthru
          _
        // Predicated region
        $region61: #{tpu_custom_call.1} parent=23 // pred_check
          %p556 = pneg %p288
        $region62: #{tpu_custom_call.1} parent=23 // pred_check_branch
          %558 = sbr.rel (%p556) target = $region64
        $region63: #{tpu_custom_call.1} parent=23 // pred_region
          %p559 = scmp.lt.s32.totalorder %s34, 1
          %s560 = scalar_select %p559, %s34, 1
          %s561 = smul.addr %s560, 2
          %s562 = scalar_lea.vmem %s10, %s561
        $region64: #{tpu_custom_call.1} parent=23 // pred_fallthru
          _
        // Predicated region
        $region65: #{tpu_custom_call.1} parent=23 // pred_check
          %p563 = pneg %p314
        $region66: #{tpu_custom_call.1} parent=23 // pred_check_branch
          %565 = sbr.rel (%p563) target = $region68
        $region67: #{tpu_custom_call.1} parent=23 // pred_region
          %s566 = sand.u32 %s304, 1
          %s567 = scalar_lea.sflag [#allocation14], %s566
          %s568 = sand.u32 %s304, 1
          %s569 = smul.addr %s568, 128
          %s570 = scalar_lea.vmem [#allocation13], %s569
          %s572 = ssub.s32 2048, 2048
          %573 = vsyncadd %s567, %s572
          %s574 = smul.addr %s34, 32
          %s575 = smul.addr %s574, 64
          %s576 = scalar_lea.hbm %s11, %s575
          %s577 = sshll.u32 %s570, 4
          %s578 = int_to_ptr.vmem [resolvable:$true] %s577
          %583 = dma.hbm_to_vmem [thread:$0]  %s576, 2048, %s578, %s567, 64, 64, 4
        $region68: #{tpu_custom_call.1} parent=23 // pred_fallthru
          _
        // Predicated region
        $region69: #{tpu_custom_call.1} parent=23 // pred_check
          %p584 = pneg %p340
        $region70: #{tpu_custom_call.1} parent=23 // pred_check_branch
          %586 = sbr.rel (%p584) target = $region72
        $region71: #{tpu_custom_call.1} parent=23 // pred_region
          %p587 = scmp.lt.s32.totalorder %s34, 1
          %s588 = scalar_select %p587, %s34, 1
          %s589 = scalar_lea.vmem %s12, %s588
        $region72: #{tpu_custom_call.1} parent=23 // pred_fallthru
          _
      $region24: #{tpu_custom_call.1} parent=5 // pred_fallthru
        _
      %p590 = scmp.le.s32.totalorder 1, %s34
      %p591 = scmp.lt.s32.totalorder %s34, 3
      %p592 = pnand %p590, %p591
      %p593 = pneg %p592
      // Predicated region
      $region73: #{tpu_custom_call.1} parent=5 // pred_check
        _
      $region74: #{tpu_custom_call.1} parent=5 // pred_check_branch
        %595 = sbr.rel (%p592) target = $region76
      $region75: #{tpu_custom_call.1} parent=5 // pred_region
        %s596 = ssub.s32 %s34, 1
        %s597 = sand.u32 %s47, 1
        %s598 = scalar_lea.sflag [#allocation5], %s597
        %s599 = sand.u32 %s47, 1
        %s600 = scalar_lea.vmem [#allocation4], %s599
        // Predicated region
        $region77: #{tpu_custom_call.1} parent=75 // pred_check
          %p601 = pneg %p60
        $region78: #{tpu_custom_call.1} parent=75 // pred_check_branch
          %603 = sbr.rel (%p601) target = $region80
        $region79: #{tpu_custom_call.1} parent=75 // pred_region
          %604 = dma.done %s598, 16
        $region80: #{tpu_custom_call.1} parent=75 // pred_fallthru
          _
        %s605 = sand.u32 %s39, 1
        %s606 = scalar_lea.sflag [#allocation8], %s605
        %s607 = sand.u32 %s73, 1
        %s608 = scalar_lea.vmem [#allocation7], %s607
        // Predicated region
        $region81: #{tpu_custom_call.1} parent=75 // pred_check
          %p609 = pneg %p86
        $region82: #{tpu_custom_call.1} parent=75 // pred_check_branch
          %611 = sbr.rel (%p609) target = $region84
        $region83: #{tpu_custom_call.1} parent=75 // pred_region
          %612 = dma.done %s606, 16
        $region84: #{tpu_custom_call.1} parent=75 // pred_fallthru
          _
        %s613 = sand.u32 %s39, 1
        %s614 = scalar_lea.sflag [#allocation8], %s613
        %s615 = sand.u32 %s99, 1
        %s616 = smul.addr %s615, 192
        %s617 = scalar_lea.vmem [#allocation9], %s616
        // Predicated region
        $region85: #{tpu_custom_call.1} parent=75 // pred_check
          %p618 = pneg %p112
        $region86: #{tpu_custom_call.1} parent=75 // pred_check_branch
          %620 = sbr.rel (%p618) target = $region88
        $region87: #{tpu_custom_call.1} parent=75 // pred_region
          %621 = dma.done %s614, 3072
        $region88: #{tpu_custom_call.1} parent=75 // pred_fallthru
          _
        %s622 = sand.u32 %s39, 1
        %s623 = scalar_lea.sflag [#allocation11], %s622
        %s624 = sand.u32 %s151, 1
        %s625 = smul.addr %s624, 64
        %s626 = scalar_lea.vmem [#allocation10], %s625
        // Predicated region
        $region89: #{tpu_custom_call.1} parent=75 // pred_check
          %p627 = pneg %p164
        $region90: #{tpu_custom_call.1} parent=75 // pred_check_branch
          %629 = sbr.rel (%p627) target = $region92
        $region91: #{tpu_custom_call.1} parent=75 // pred_region
          %630 = dma.done %s623, 1024
        $region92: #{tpu_custom_call.1} parent=75 // pred_fallthru
          _
        %s631 = sand.u32 %s39, 1
        %s632 = scalar_lea.sflag [#allocation11], %s631
        %s633 = sand.u32 %s255, 1
        %s634 = smul.addr %s633, 128
        %s635 = scalar_lea.vmem [#allocation12], %s634
        // Predicated region
        $region93: #{tpu_custom_call.1} parent=75 // pred_check
          %p636 = pneg %p268
        $region94: #{tpu_custom_call.1} parent=75 // pred_check_branch
          %638 = sbr.rel (%p636) target = $region96
        $region95: #{tpu_custom_call.1} parent=75 // pred_region
          %639 = dma.done %s632, 2048
        $region96: #{tpu_custom_call.1} parent=75 // pred_fallthru
          _
        %s640 = sand.u32 %s307, 1
        %s641 = scalar_lea.sflag [#allocation14], %s640
        %s642 = sand.u32 %s307, 1
        %s643 = smul.addr %s642, 128
        %s644 = scalar_lea.vmem [#allocation13], %s643
        // Predicated region
        $region97: #{tpu_custom_call.1} parent=75 // pred_check
          %p645 = pneg %p320
        $region98: #{tpu_custom_call.1} parent=75 // pred_check_branch
          %647 = sbr.rel (%p645) target = $region100
        $region99: #{tpu_custom_call.1} parent=75 // pred_region
          %648 = dma.done %s641, 2048
        $region100: #{tpu_custom_call.1} parent=75 // pred_fallthru
          _
        %s649 = sand.u32 %s47, 1
        %s650 = scalar_lea.sflag [#allocation5], %s649
        %s651 = sand.u32 %s47, 1
        %s652 = scalar_lea.vmem [#allocation4], %s651
        %p653 = pneg %p60
        %p654 = pneg %p57
        %s655 = sand.u32 %s39, 1
        %s656 = scalar_lea.sflag [#allocation8], %s655
        %s657 = sand.u32 %s73, 1
        %s658 = scalar_lea.vmem [#allocation7], %s657
        %p659 = pneg %p86
        %p660 = pneg %p83
        %s661 = sand.u32 %s39, 1
        %s662 = scalar_lea.sflag [#allocation8], %s661
        %s663 = sand.u32 %s99, 1
        %s664 = smul.addr %s663, 192
        %s665 = scalar_lea.vmem [#allocation9], %s664
        %p666 = pneg %p112
        %p667 = pneg %p109
        %p668 = scmp.lt.s32.totalorder %s39, 1
        %s669 = scalar_select %p668, %s39, 1
        %s670 = smul.addr %s669, 3
        %s671 = scalar_lea.vmem %s4, %s670
        %p672 = pneg %p138
        %p673 = pneg %p135
        %s674 = sand.u32 %s39, 1
        %s675 = scalar_lea.sflag [#allocation11], %s674
        %s676 = sand.u32 %s151, 1
        %s677 = smul.addr %s676, 64
        %s678 = scalar_lea.vmem [#allocation10], %s677
        %p679 = pneg %p164
        %p680 = pneg %p161
        %p681 = scmp.lt.s32.totalorder %s39, 1
        %s682 = scalar_select %p681, %s39, 1
        %s683 = scalar_lea.vmem %s6, %s682
        %p684 = pneg %p190
        %p685 = pneg %p187
        %p686 = scmp.lt.s32.totalorder %s39, 1
        %s687 = scalar_select %p686, %s39, 1
        %s688 = scalar_lea.vmem %s7, %s687
        %p689 = pneg %p216
        %p690 = pneg %p213
        %p691 = scmp.lt.s32.totalorder %s39, 1
        %s692 = scalar_select %p691, %s39, 1
        %s693 = scalar_lea.vmem %s8, %s692
        %p694 = pneg %p242
        %p695 = pneg %p239
        %s696 = sand.u32 %s39, 1
        %s697 = scalar_lea.sflag [#allocation11], %s696
        %s698 = sand.u32 %s255, 1
        %s699 = smul.addr %s698, 128
        %s700 = scalar_lea.vmem [#allocation12], %s699
        %p701 = pneg %p268
        %p702 = pneg %p265
        %p703 = scmp.lt.s32.totalorder %s39, 1
        %s704 = scalar_select %p703, %s39, 1
        %s705 = smul.addr %s704, 2
        %s706 = scalar_lea.vmem %s10, %s705
        %p707 = pneg %p294
        %p708 = pneg %p291
        %s709 = sand.u32 %s307, 1
        %s710 = scalar_lea.sflag [#allocation14], %s709
        %s711 = sand.u32 %s307, 1
        %s712 = smul.addr %s711, 128
        %s713 = scalar_lea.vmem [#allocation13], %s712
        %p714 = pneg %p320
        %p715 = pneg %p317
        %p716 = scmp.lt.s32.totalorder %s39, 1
        %s717 = scalar_select %p716, %s39, 1
        %s718 = scalar_lea.vmem %s12, %s717
        %p719 = pneg %p346
        %p720 = pneg %p343
        %p721 = pneg %p367
        %p722 = pneg %p364
        %p723 = pneg %p388
        %p724 = pneg %p385
        %p725 = pneg %p409
        %p726 = pneg %p406
        %p727 = scmp.lt.s32.totalorder %s39, 1
        %s728 = scalar_select %p727, %s39, 1
        %s729 = smul.addr %s728, 3
        %s730 = scalar_lea.vmem %s4, %s729
        %p731 = scmp.lt.s32.totalorder %s39, 1
        %s732 = scalar_select %p731, %s39, 1
        %s733 = scalar_lea.vmem %s6, %s732
        %p734 = scmp.lt.s32.totalorder %s39, 1
        %s735 = scalar_select %p734, %s39, 1
        %s736 = scalar_lea.vmem %s7, %s735
        %p737 = scmp.lt.s32.totalorder %s39, 1
        %s738 = scalar_select %p737, %s39, 1
        %s739 = scalar_lea.vmem %s8, %s738
        %p740 = scmp.lt.s32.totalorder %s39, 1
        %s741 = scalar_select %p740, %s39, 1
        %s742 = smul.addr %s741, 2
        %s743 = scalar_lea.vmem %s10, %s742
        %p744 = scmp.lt.s32.totalorder %s39, 1
        %s745 = scalar_select %p744, %s39, 1
        %s746 = scalar_lea.vmem %s12, %s745
        %p748 = scmp.eq.s32.totalorder %s39, 0
        // Predicated region
        $region101: #{tpu_custom_call.1} parent=75 // pred_check
          %p749 = pneg %p748
        $region102: #{tpu_custom_call.1} parent=75 // pred_check_branch
          %751 = sbr.rel (%p749) target = $region104
        $region103: #{tpu_custom_call.1} parent=75 // pred_region
          // Predicated region
          $region105: #{tpu_custom_call.1} parent=103 // pred_check
            _
          $region106: #{tpu_custom_call.1} parent=103 // pred_check_branch
            %753 = sbr.rel target = $region108
          $region107: #{tpu_custom_call.1} parent=103 // pred_region
            %754 = sst [smem:[#allocation18]] [#allocation17]
            %755 = sst [smem:[#allocation19]] [#allocation16]
          $region108: #{tpu_custom_call.1} parent=103 // pred_fallthru
            _
          %757 = shalt.err (0)
          %s759 = sshll.u32 [#allocation15], 4
          %s760 = int_to_ptr.vmem [resolvable:$true] %s759
          %762 = dma.hbm_to_vmem [thread:$0]  %s0, 256, %s760, [#allocation3]
          %v763 = vlaneseq
          %v764 = vshrl.u32 %v763, 7
          %v765 = vlaneseq
          %v766 = vand.u32 %v765, 127
          %vm767 = vcmp.le.s32.totalorder %v766, %v764
          %v768 = vsel %vm767, 0.0, -1e+09
          %vm769 = vcmask 64512
          %770 = vst.msk [vmem:[#allocation2] sm:$0xff] %vm769, %v768
          %s771 = smul.u32 16, 1
          %s772 = sshll.u32 %s771, 4
          %773 = dma.done [#allocation3], %s772
        $region104: #{tpu_custom_call.1} parent=75 // pred_fallthru
          _
        %v774 = vld [vmem:[#allocation15] sm:$0xff]
        %v775 = vld [vmem:[#allocation15 + $0x8] sm:$0xff]
        %v776 = vld [vmem:[%s600] sm:$0x1]
        %v777 = vld [vmem:[%s608] sm:$0x1]
        %778 = vadd.xlane.f32.xlu0 %v774
        %v779 = vpop.xlane.xlu0 %778
        %780 = vadd.xlane.f32.xlu0 %v775
        %v781 = vpop.xlane.xlu0 %780
        %v782 = vrcp.pop 128.0
        %v783 = vmul.f32 %v779, %v782
        %v784 = vmul.f32 %v781, %v782
        %v785 = vsub.f32 %v774, %v783
        %v786 = vsub.f32 %v775, %v784
        %v787 = vmul.f32 %v785, %v785
        %v788 = vmul.f32 %v786, %v786
        %789 = vadd.xlane.f32.xlu0 %v787
        %v790 = vpop.xlane.xlu0 %789
        %791 = vadd.xlane.f32.xlu0 %v788
        %v792 = vpop.xlane.xlu0 %791
        %v793 = vmul.f32 %v790, %v782
        %v794 = vmul.f32 %v792, %v782
        %v795 = vadd.f32 %v793, 1e-05
        %v796 = vadd.f32 %v794, 1e-05
        %v797 = vrsqrt.pop %v795
        %v798 = vrsqrt.pop %v796
        %v799 = vmul.f32 %v785, %v797
        %v800 = vmul.f32 %v786, %v798
        %v802 = vlaneseq
        %v803 = vshrl.u32 %v802, 7
        %v804 = vsub.s32 0, %v803
        %v805 = vrot.slane %v776, %v804
        %v807 = vmul.f32 %v799, %v805
        %v808 = vmul.f32 %v800, %v805
        %v810 = vlaneseq
        %v811 = vshrl.u32 %v810, 7
        %v812 = vsub.s32 0, %v811
        %v813 = vrot.slane %v777, %v812
        %v815 = vadd.f32 %v807, %v813
        %v816 = vadd.f32 %v808, %v813
        %v817 = vpack.c.bf16 %v816, %v815
        %v818 = vld [vmem:[%s617] sm:$0xff]
        %v819 = vld [vmem:[%s617 + $0x8] sm:$0xf]
        %v820 = vld [vmem:[%s617 + $0xc] sm:$0xff]
        %v821 = vld [vmem:[%s617 + $0x14] sm:$0xf]
        %v822 = vld [vmem:[%s617 + $0x18] sm:$0xff]
        %v823 = vld [vmem:[%s617 + $0x20] sm:$0xf]
        %v824 = vld [vmem:[%s617 + $0x24] sm:$0xff]
        %v825 = vld [vmem:[%s617 + $0x2c] sm:$0xf]
        %v826 = vld [vmem:[%s617 + $0x30] sm:$0xff]
        %v827 = vld [vmem:[%s617 + $0x38] sm:$0xf]
        %v828 = vld [vmem:[%s617 + $0x3c] sm:$0xff]
        %v829 = vld [vmem:[%s617 + $0x44] sm:$0xf]
        %v830 = vld [vmem:[%s617 + $0x48] sm:$0xff]
        %v831 = vld [vmem:[%s617 + $0x50] sm:$0xf]
        %v832 = vld [vmem:[%s617 + $0x54] sm:$0xff]
        %v833 = vld [vmem:[%s617 + $0x5c] sm:$0xf]
        %v834 = vld [vmem:[%s617 + $0x60] sm:$0xff]
        %v835 = vld [vmem:[%s617 + $0x68] sm:$0xf]
        %v836 = vld [vmem:[%s617 + $0x6c] sm:$0xff]
        %v837 = vld [vmem:[%s617 + $0x74] sm:$0xf]
        %v838 = vld [vmem:[%s617 + $0x78] sm:$0xff]
        %v839 = vld [vmem:[%s617 + $0x80] sm:$0xf]
        %v840 = vld [vmem:[%s617 + $0x84] sm:$0xff]
        %v841 = vld [vmem:[%s617 + $0x8c] sm:$0xf]
        %v842 = vld [vmem:[%s617 + $0x90] sm:$0xff]
        %v843 = vld [vmem:[%s617 + $0x98] sm:$0xf]
        %v844 = vld [vmem:[%s617 + $0x9c] sm:$0xff]
        %v845 = vld [vmem:[%s617 + $0xa4] sm:$0xf]
        %v846 = vld [vmem:[%s617 + $0xa8] sm:$0xff]
        %v847 = vld [vmem:[%s617 + $0xb0] sm:$0xf]
        %v848 = vld [vmem:[%s617 + $0xb4] sm:$0xff]
        %v849 = vld [vmem:[%s617 + $0xbc] sm:$0xf]
        %v850 = vld [vmem:[%s730] sm:$0x7]
        %v852 = vlaneseq
        %v853 = vshrl.u32 %v852, 7
        %v854 = vsub.s32 0, %v853
        %v855 = vrot.slane %v850, %v854
        %v856 = vlaneseq
        %v857 = vshrl.u32 %v856, 7
        %v858 = vsub.s32 1, %v857
        %v859 = vrot.slane %v850, %v858
        %v860 = vlaneseq
        %v861 = vshrl.u32 %v860, 7
        %v862 = vsub.s32 2, %v861
        %v863 = vrot.slane %v850, %v862
        %v899 = vunpack.c.l.b16 %v818
        %v900 = vunpack.c.h.b16 %v818
        %v901 = vunpack.c.l.b16 %v819
        %v902 = vunpack.c.l.b16 %v820
        %v903 = vunpack.c.h.b16 %v820
        %v904 = vunpack.c.l.b16 %v821
        %v905 = vunpack.c.l.b16 %v822
        %v906 = vunpack.c.h.b16 %v822
        %v907 = vunpack.c.l.b16 %v823
        %v908 = vunpack.c.l.b16 %v824
        %v909 = vunpack.c.h.b16 %v824
        %v910 = vunpack.c.l.b16 %v825
        %v911 = vunpack.c.l.b16 %v826
        %v912 = vunpack.c.h.b16 %v826
        %v913 = vunpack.c.l.b16 %v827
        %v914 = vunpack.c.l.b16 %v828
        %v915 = vunpack.c.h.b16 %v828
        %v916 = vunpack.c.l.b16 %v829
        %v917 = vunpack.c.l.b16 %v830
        %v918 = vunpack.c.h.b16 %v830
        %v919 = vunpack.c.l.b16 %v831
        %v920 = vunpack.c.l.b16 %v832
        %v921 = vunpack.c.h.b16 %v832
        %v922 = vunpack.c.l.b16 %v833
        %v923 = vunpack.c.l.b16 %v834
        %v924 = vunpack.c.h.b16 %v834
        %v925 = vunpack.c.l.b16 %v835
        %v926 = vunpack.c.l.b16 %v836
        %v927 = vunpack.c.h.b16 %v836
        %v928 = vunpack.c.l.b16 %v837
        %v929 = vunpack.c.l.b16 %v838
        %v930 = vunpack.c.h.b16 %v838
        %v931 = vunpack.c.l.b16 %v839
        %v932 = vunpack.c.l.b16 %v840
        %v933 = vunpack.c.h.b16 %v840
        %v934 = vunpack.c.l.b16 %v841
        %v935 = vunpack.c.l.b16 %v842
        %v936 = vunpack.c.h.b16 %v842
        %v937 = vunpack.c.l.b16 %v843
        %v938 = vunpack.c.l.b16 %v844
        %v939 = vunpack.c.h.b16 %v844
        %v940 = vunpack.c.l.b16 %v845
        %v941 = vunpack.c.l.b16 %v846
        %v942 = vunpack.c.h.b16 %v846
        %v943 = vunpack.c.l.b16 %v847
        %v944 = vunpack.c.l.b16 %v848
        %v945 = vunpack.c.h.b16 %v848
        %v946 = vunpack.c.l.b16 %v849
        %v947 = vpack.c.b16 %v902, %v899
        %v948 = vpack.c.b16 %v903, %v900
        %v949 = vpack.c.b16 %v904, %v901
        %v950 = vpack.c.b16 %v908, %v905
        %v951 = vpack.c.b16 %v909, %v906
        %v952 = vpack.c.b16 %v910, %v907
        %v953 = vpack.c.b16 %v914, %v911
        %v954 = vpack.c.b16 %v915, %v912
        %v955 = vpack.c.b16 %v916, %v913
        %v956 = vpack.c.b16 %v920, %v917
        %v957 = vpack.c.b16 %v921, %v918
        %v958 = vpack.c.b16 %v922, %v919
        %v959 = vpack.c.b16 %v926, %v923
        %v960 = vpack.c.b16 %v927, %v924
        %v961 = vpack.c.b16 %v928, %v925
        %v962 = vpack.c.b16 %v932, %v929
        %v963 = vpack.c.b16 %v933, %v930
        %v964 = vpack.c.b16 %v934, %v931
        %v965 = vpack.c.b16 %v938, %v935
        %v966 = vpack.c.b16 %v939, %v936
        %v967 = vpack.c.b16 %v940, %v937
        %v968 = vpack.c.b16 %v944, %v941
        %v969 = vpack.c.b16 %v945, %v942
        %v970 = vpack.c.b16 %v946, %v943
        %995 = vmatprep.subr.bf16.mxu0 %v948
        %996 = vmatpush1.bf16.msra.mxu0 %v947
        %997 = vmatprep.subr.bf16.mxu0 %v951
        %998 = vmatpush1.bf16.msra.mxu0 %v950
        %999 = vmatprep.subr.bf16.mxu0 %v954
        %1000 = vmatpush1.bf16.msra.mxu0 %v953
        %1001 = vmatprep.subr.bf16.mxu0 %v957
        %1002 = vmatpush1.bf16.msra.mxu0 %v956
        %1003 = vmatprep.subr.bf16.mxu0 %v960
        %1004 = vmatpush1.bf16.msra.mxu0 %v959
        %1005 = vmatprep.subr.bf16.mxu0 %v963
        %1006 = vmatpush1.bf16.msra.mxu0 %v962
        %1007 = vmatprep.subr.bf16.mxu0 %v966
        %1008 = vmatpush1.bf16.msra.mxu0 %v965
        %1009 = vmatprep.subr.bf16.mxu0 %v969
        %1010 = vmatpush1.bf16.msra.mxu0 %v968
        %1011 = vmatprep.subr.bf16.mxu0 0
        %1012 = vmatpush1.bf16.msra.mxu0 0
        %1013 = vmatprep.subr.bf16.mxu0 0
        %1014 = vmatpush1.bf16.msra.mxu0 0
        %1015 = vmatprep.subr.bf16.mxu0 0
        %1016 = vmatpush1.bf16.msra.mxu0 0
        %1017 = vmatprep.subr.bf16.mxu0 0
        %1018 = vmatpush1.bf16.msra.mxu0 0
        %1019 = vmatprep.subr.bf16.mxu0 0
        %1020 = vmatpush1.bf16.msra.mxu0 0
        %1021 = vmatprep.subr.bf16.mxu0 0
        %1022 = vmatpush1.bf16.msra.mxu0 0
        %1023 = vmatprep.subr.bf16.mxu0 0
        %1024 = vmatpush1.bf16.msra.mxu0 0
        %1025 = vmatprep.subr.bf16.mxu0 0
        %1026 = vmatpush1.bf16.msra.mxu0 0
        %1027 = vmatprep.mubr.bf16.mxu0 0
        %1028 = vmatmul.mubr.bf16.gmra.mrb[0].mxu0 %v817
        %v1029 = vpop.f32.mrb[0].mxu0
        %v1030 = vadd.f32 %v855, %v1029
        %v1031 = vpop.f32.mrb[0].mxu0
        %v1032 = vadd.f32 %v859, %v1031
        %v1033 = vpop.f32.mrb[0].mxu0
        %v1034 = vadd.f32 %v855, %v1033
        %v1035 = vpop.f32.mrb[0].mxu0
        %v1036 = vadd.f32 %v859, %v1035
        %1037 = vdwg.mxu0
        %1038 = vmatprep.subr.bf16.mxu0 0
        %1039 = vmatpush1.bf16.msra.mxu0 %v949
        %1040 = vmatprep.subr.bf16.mxu0 0
        %1041 = vmatpush1.bf16.msra.mxu0 %v952
        %1042 = vmatprep.subr.bf16.mxu0 0
        %1043 = vmatpush1.bf16.msra.mxu0 %v955
        %1044 = vmatprep.subr.bf16.mxu0 0
        %1045 = vmatpush1.bf16.msra.mxu0 %v958
        %1046 = vmatprep.subr.bf16.mxu0 0
        %1047 = vmatpush1.bf16.msra.mxu0 %v961
        %1048 = vmatprep.subr.bf16.mxu0 0
        %1049 = vmatpush1.bf16.msra.mxu0 %v964
        %1050 = vmatprep.subr.bf16.mxu0 0
        %1051 = vmatpush1.bf16.msra.mxu0 %v967
        %1052 = vmatprep.subr.bf16.mxu0 0
        %1053 = vmatpush1.bf16.msra.mxu0 %v970
        %1054 = vmatprep.subr.bf16.mxu0 0
        %1055 = vmatpush1.bf16.msra.mxu0 0
        %1056 = vmatprep.subr.bf16.mxu0 0
        %1057 = vmatpush1.bf16.msra.mxu0 0
        %1058 = vmatprep.subr.bf16.mxu0 0
        %1059 = vmatpush1.bf16.msra.mxu0 0
        %1060 = vmatprep.subr.bf16.mxu0 0
        %1061 = vmatpush1.bf16.msra.mxu0 0
        %1062 = vmatprep.subr.bf16.mxu0 0
        %1063 = vmatpush1.bf16.msra.mxu0 0
        %1064 = vmatprep.subr.bf16.mxu0 0
        %1065 = vmatpush1.bf16.msra.mxu0 0
        %1066 = vmatprep.subr.bf16.mxu0 0
        %1067 = vmatpush1.bf16.msra.mxu0 0
        %1068 = vmatprep.subr.bf16.mxu0 0
        %1069 = vmatpush1.bf16.msra.mxu0 0
        %1070 = vmatprep.mubr.bf16.mxu0 0
        %1071 = vmatmul.mubr.bf16.gmra.mrb[0].mxu0 %v817
        %v1072 = vpop.f32.mrb[0].mxu0
        %v1073 = vadd.f32 %v863, %v1072
        %v1074 = vpop.f32.mrb[0].mxu0
        %v1075 = vpop.f32.mrb[0].mxu0
        %v1076 = vadd.f32 %v863, %v1075
        %v1077 = vpop.f32.mrb[0].mxu0
        %1078 = vdwg.mxu0
        %1081 = vrot.lane.b32.xlu0 %v1030, 96
        %v1082 = vpop.permute.xlu0 %1081
        %1083 = vrot.lane.b32.xlu0 %v1034, 96
        %v1084 = vpop.permute.xlu0 %1083
        %1087 = vrot.lane.b32.xlu0 %v1030, 64
        %v1088 = vpop.permute.xlu0 %1087
        %1089 = vrot.lane.b32.xlu0 %v1034, 64
        %v1090 = vpop.permute.xlu0 %1089
        %1093 = vrot.lane.b32.xlu0 %v1030, 32
        %v1094 = vpop.permute.xlu0 %1093
        %1095 = vrot.lane.b32.xlu0 %v1034, 32
        %v1096 = vpop.permute.xlu0 %1095
        %1101 = vrot.lane.b32.xlu0 %v1032, 96
        %v1102 = vpop.permute.xlu0 %1101
        %1103 = vrot.lane.b32.xlu0 %v1036, 96
        %v1104 = vpop.permute.xlu0 %1103
        %1107 = vrot.lane.b32.xlu0 %v1032, 64
        %v1108 = vpop.permute.xlu0 %1107
        %1109 = vrot.lane.b32.xlu0 %v1036, 64
        %v1110 = vpop.permute.xlu0 %1109
        %1113 = vrot.lane.b32.xlu0 %v1032, 32
        %v1114 = vpop.permute.xlu0 %1113
        %1115 = vrot.lane.b32.xlu0 %v1036, 32
        %v1116 = vpop.permute.xlu0 %1115
        %1121 = vrot.lane.b32.xlu0 %v1073, 96
        %v1122 = vpop.permute.xlu0 %1121
        %1123 = vrot.lane.b32.xlu0 %v1076, 96
        %v1124 = vpop.permute.xlu0 %1123
        %1127 = vrot.lane.b32.xlu0 %v1073, 64
        %v1128 = vpop.permute.xlu0 %1127
        %1129 = vrot.lane.b32.xlu0 %v1076, 64
        %v1130 = vpop.permute.xlu0 %1129
        %1133 = vrot.lane.b32.xlu0 %v1073, 32
        %v1134 = vpop.permute.xlu0 %1133
        %1135 = vrot.lane.b32.xlu0 %v1076, 32
        %v1136 = vpop.permute.xlu0 %1135
        %v1139 = vpack.c.bf16 %v1030, %v1030
        %v1140 = vpack.c.bf16 %v1034, %v1034
        %v1141 = vpack.c.bf16 %v1082, %v1082
        %v1142 = vpack.c.bf16 %v1084, %v1084
        %v1143 = vpack.c.bf16 %v1088, %v1088
        %v1144 = vpack.c.bf16 %v1090, %v1090
        %v1145 = vpack.c.bf16 %v1094, %v1094
        %v1146 = vpack.c.bf16 %v1096, %v1096
        %v1147 = vpack.c.bf16 %v1032, %v1032
        %v1148 = vpack.c.bf16 %v1036, %v1036
        %v1149 = vpack.c.bf16 %v1102, %v1102
        %v1150 = vpack.c.bf16 %v1104, %v1104
        %v1151 = vpack.c.bf16 %v1108, %v1108
        %v1152 = vpack.c.bf16 %v1110, %v1110
        %v1153 = vpack.c.bf16 %v1114, %v1114
        %v1154 = vpack.c.bf16 %v1116, %v1116
        %v1155 = vld [vmem:[#allocation2] sm:$0xff]
        %vm1156 = vcmask 261120
        %v1158 = vsel %vm1156, %v1139, 0
        %v1161 = vsel %vm1156, %v1147, 0
        %1163 = vmatprep.subr.bf16.mxu0 0
        %1164 = vmatpush1.bf16.xpose.msra.mxu0 %v1161
        %1165 = vmatprep.subr.bf16.mxu0 0
        %1166 = vmatpush1.bf16.xpose.msra.mxu0 0
        %1167 = vmatprep.subr.bf16.mxu0 0
        %1168 = vmatpush1.bf16.xpose.msra.mxu0 0
        %1169 = vmatprep.subr.bf16.mxu0 0
        %1170 = vmatpush1.bf16.xpose.msra.mxu0 0
        %1171 = vmatprep.subr.bf16.mxu0 0
        %1172 = vmatpush1.bf16.xpose.msra.mxu0 0
        %1173 = vmatprep.subr.bf16.mxu0 0
        %1174 = vmatpush1.bf16.xpose.msra.mxu0 0
        %1175 = vmatprep.subr.bf16.mxu0 0
        %1176 = vmatpush1.bf16.xpose.msra.mxu0 0
        %1177 = vmatprep.subr.bf16.mxu0 0
        %1178 = vmatpush1.bf16.xpose.msra.mxu0 0
        %1179 = vmatprep.subr.bf16.mxu0 0
        %1180 = vmatpush1.bf16.xpose.msra.mxu0 0
        %1181 = vmatprep.subr.bf16.mxu0 0
        %1182 = vmatpush1.bf16.xpose.msra.mxu0 0
        %1183 = vmatprep.subr.bf16.mxu0 0
        %1184 = vmatpush1.bf16.xpose.msra.mxu0 0
        %1185 = vmatprep.subr.bf16.mxu0 0
        %1186 = vmatpush1.bf16.xpose.msra.mxu0 0
        %1187 = vmatprep.subr.bf16.mxu0 0
        %1188 = vmatpush1.bf16.xpose.msra.mxu0 0
        %1189 = vmatprep.subr.bf16.mxu0 0
        %1190 = vmatpush1.bf16.xpose.msra.mxu0 0
        %1191 = vmatprep.subr.bf16.mxu0 0
        %1192 = vmatpush1.bf16.xpose.msra.mxu0 0
        %1193 = vmatprep.subr.bf16.mxu0 0
        %1194 = vmatpush1.bf16.xpose.msra.mxu0 0
        %1195 = vmatprep.mubr.bf16.mxu0 0
        %1196 = vmatmul.mubr.bf16.gmra.mrb[0].mxu0 %v1158
        %v1197 = vpop.f32.mrb[0].mxu0
        %v1198 = vadd.f32 %v1155, %v1197
        %v1199 = vpop.f32.mrb[0].mxu0
        %v1200 = vpop.f32.mrb[0].mxu0
        %v1201 = vpop.f32.mrb[0].mxu0
        %1202 = vdwg.mxu0
        %v1204 = vsel %vm1156, %v1140, 0
        %v1207 = vsel %vm1156, %v1148, 0
        %1209 = vmatprep.subr.bf16.mxu0 0
        %1210 = vmatpush1.bf16.xpose.msra.mxu0 %v1207
        %1211 = vmatprep.subr.bf16.mxu0 0
        %1212 = vmatpush1.bf16.xpose.msra.mxu0 0
        %1213 = vmatprep.subr.bf16.mxu0 0
        %1214 = vmatpush1.bf16.xpose.msra.mxu0 0
        %1215 = vmatprep.subr.bf16.mxu0 0
        %1216 = vmatpush1.bf16.xpose.msra.mxu0 0
        %1217 = vmatprep.subr.bf16.mxu0 0
        %1218 = vmatpush1.bf16.xpose.msra.mxu0 0
        %1219 = vmatprep.subr.bf16.mxu0 0
        %1220 = vmatpush1.bf16.xpose.msra.mxu0 0
        %1221 = vmatprep.subr.bf16.mxu0 0
        %1222 = vmatpush1.bf16.xpose.msra.mxu0 0
        %1223 = vmatprep.subr.bf16.mxu0 0
        %1224 = vmatpush1.bf16.xpose.msra.mxu0 0
        %1225 = vmatprep.subr.bf16.mxu0 0
        %1226 = vmatpush1.bf16.xpose.msra.mxu0 0
        %1227 = vmatprep.subr.bf16.mxu0 0
        %1228 = vmatpush1.bf16.xpose.msra.mxu0 0
        %1229 = vmatprep.subr.bf16.mxu0 0
        %1230 = vmatpush1.bf16.xpose.msra.mxu0 0
        %1231 = vmatprep.subr.bf16.mxu0 0
        %1232 = vmatpush1.bf16.xpose.msra.mxu0 0
        %1233 = vmatprep.subr.bf16.mxu0 0
        %1234 = vmatpush1.bf16.xpose.msra.mxu0 0
        %1235 = vmatprep.subr.bf16.mxu0 0
        %1236 = vmatpush1.bf16.xpose.msra.mxu0 0
        %1237 = vmatprep.subr.bf16.mxu0 0
        %1238 = vmatpush1.bf16.xpose.msra.mxu0 0
        %1239 = vmatprep.subr.bf16.mxu0 0
        %1240 = vmatpush1.bf16.xpose.msra.mxu0 0
        %1241 = vmatprep.mubr.bf16.mxu0 0
        %1242 = vmatmul.mubr.bf16.gmra.mrb[0].mxu0 %v1204
        %v1243 = vpop.f32.mrb[0].mxu0
        %v1244 = vadd.f32 %v1155, %v1243
        %v1245 = vpop.f32.mrb[0].mxu0
        %v1246 = vpop.f32.mrb[0].mxu0
        %v1247 = vpop.f32.mrb[0].mxu0
        %1248 = vdwg.mxu0
        %v1250 = vsel %vm1156, %v1141, 0
        %v1253 = vsel %vm1156, %v1149, 0
        %1255 = vmatprep.subr.bf16.mxu0 0
        %1256 = vmatpush1.bf16.xpose.msra.mxu0 %v1253
        %1257 = vmatprep.subr.bf16.mxu0 0
        %1258 = vmatpush1.bf16.xpose.msra.mxu0 0
        %1259 = vmatprep.subr.bf16.mxu0 0
        %1260 = vmatpush1.bf16.xpose.msra.mxu0 0
        %1261 = vmatprep.subr.bf16.mxu0 0
        %1262 = vmatpush1.bf16.xpose.msra.mxu0 0
        %1263 = vmatprep.subr.bf16.mxu0 0
        %1264 = vmatpush1.bf16.xpose.msra.mxu0 0
        %1265 = vmatprep.subr.bf16.mxu0 0
        %1266 = vmatpush1.bf16.xpose.msra.mxu0 0
        %1267 = vmatprep.subr.bf16.mxu0 0
        %1268 = vmatpush1.bf16.xpose.msra.mxu0 0
        %1269 = vmatprep.subr.bf16.mxu0 0
        %1270 = vmatpush1.bf16.xpose.msra.mxu0 0
        %1271 = vmatprep.subr.bf16.mxu0 0
        %1272 = vmatpush1.bf16.xpose.msra.mxu0 0
        %1273 = vmatprep.subr.bf16.mxu0 0
        %1274 = vmatpush1.bf16.xpose.msra.mxu0 0
        %1275 = vmatprep.subr.bf16.mxu0 0
        %1276 = vmatpush1.bf16.xpose.msra.mxu0 0
        %1277 = vmatprep.subr.bf16.mxu0 0
        %1278 = vmatpush1.bf16.xpose.msra.mxu0 0
        %1279 = vmatprep.subr.bf16.mxu0 0
        %1280 = vmatpush1.bf16.xpose.msra.mxu0 0
        %1281 = vmatprep.subr.bf16.mxu0 0
        %1282 = vmatpush1.bf16.xpose.msra.mxu0 0
        %1283 = vmatprep.subr.bf16.mxu0 0
        %1284 = vmatpush1.bf16.xpose.msra.mxu0 0
        %1285 = vmatprep.subr.bf16.mxu0 0
        %1286 = vmatpush1.bf16.xpose.msra.mxu0 0
        %1287 = vmatprep.mubr.bf16.mxu0 0
        %1288 = vmatmul.mubr.bf16.gmra.mrb[0].mxu0 %v1250
        %v1289 = vpop.f32.mrb[0].mxu0
        %v1290 = vadd.f32 %v1155, %v1289
        %v1291 = vpop.f32.mrb[0].mxu0
        %v1292 = vpop.f32.mrb[0].mxu0
        %v1293 = vpop.f32.mrb[0].mxu0
        %1294 = vdwg.mxu0
        %v1296 = vsel %vm1156, %v1142, 0
        %v1299 = vsel %vm1156, %v1150, 0
        %1301 = vmatprep.subr.bf16.mxu0 0
        %1302 = vmatpush1.bf16.xpose.msra.mxu0 %v1299
        %1303 = vmatprep.subr.bf16.mxu0 0
        %1304 = vmatpush1.bf16.xpose.msra.mxu0 0
        %1305 = vmatprep.subr.bf16.mxu0 0
        %1306 = vmatpush1.bf16.xpose.msra.mxu0 0
        %1307 = vmatprep.subr.bf16.mxu0 0
        %1308 = vmatpush1.bf16.xpose.msra.mxu0 0
        %1309 = vmatprep.subr.bf16.mxu0 0
        %1310 = vmatpush1.bf16.xpose.msra.mxu0 0
        %1311 = vmatprep.subr.bf16.mxu0 0
        %1312 = vmatpush1.bf16.xpose.msra.mxu0 0
        %1313 = vmatprep.subr.bf16.mxu0 0
        %1314 = vmatpush1.bf16.xpose.msra.mxu0 0
        %1315 = vmatprep.subr.bf16.mxu0 0
        %1316 = vmatpush1.bf16.xpose.msra.mxu0 0
        %1317 = vmatprep.subr.bf16.mxu0 0
        %1318 = vmatpush1.bf16.xpose.msra.mxu0 0
        %1319 = vmatprep.subr.bf16.mxu0 0
        %1320 = vmatpush1.bf16.xpose.msra.mxu0 0
        %1321 = vmatprep.subr.bf16.mxu0 0
        %1322 = vmatpush1.bf16.xpose.msra.mxu0 0
        %1323 = vmatprep.subr.bf16.mxu0 0
        %1324 = vmatpush1.bf16.xpose.msra.mxu0 0
        %1325 = vmatprep.subr.bf16.mxu0 0
        %1326 = vmatpush1.bf16.xpose.msra.mxu0 0
        %1327 = vmatprep.subr.bf16.mxu0 0
        %1328 = vmatpush1.bf16.xpose.msra.mxu0 0
        %1329 = vmatprep.subr.bf16.mxu0 0
        %1330 = vmatpush1.bf16.xpose.msra.mxu0 0
        %1331 = vmatprep.subr.bf16.mxu0 0
        %1332 = vmatpush1.bf16.xpose.msra.mxu0 0
        %1333 = vmatprep.mubr.bf16.mxu0 0
        %1334 = vmatmul.mubr.bf16.gmra.mrb[0].mxu0 %v1296
        %v1335 = vpop.f32.mrb[0].mxu0
        %v1336 = vadd.f32 %v1155, %v1335
        %v1337 = vpop.f32.mrb[0].mxu0
        %v1338 = vpop.f32.mrb[0].mxu0
        %v1339 = vpop.f32.mrb[0].mxu0
        %1340 = vdwg.mxu0
        %v1342 = vsel %vm1156, %v1143, 0
        %v1345 = vsel %vm1156, %v1151, 0
        %1347 = vmatprep.subr.bf16.mxu0 0
        %1348 = vmatpush1.bf16.xpose.msra.mxu0 %v1345
        %1349 = vmatprep.subr.bf16.mxu0 0
        %1350 = vmatpush1.bf16.xpose.msra.mxu0 0
        %1351 = vmatprep.subr.bf16.mxu0 0
        %1352 = vmatpush1.bf16.xpose.msra.mxu0 0
        %1353 = vmatprep.subr.bf16.mxu0 0
        %1354 = vmatpush1.bf16.xpose.msra.mxu0 0
        %1355 = vmatprep.subr.bf16.mxu0 0
        %1356 = vmatpush1.bf16.xpose.msra.mxu0 0
        %1357 = vmatprep.subr.bf16.mxu0 0
        %1358 = vmatpush1.bf16.xpose.msra.mxu0 0
        %1359 = vmatprep.subr.bf16.mxu0 0
        %1360 = vmatpush1.bf16.xpose.msra.mxu0 0
        %1361 = vmatprep.subr.bf16.mxu0 0
        %1362 = vmatpush1.bf16.xpose.msra.mxu0 0
        %1363 = vmatprep.subr.bf16.mxu0 0
        %1364 = vmatpush1.bf16.xpose.msra.mxu0 0
        %1365 = vmatprep.subr.bf16.mxu0 0
        %1366 = vmatpush1.bf16.xpose.msra.mxu0 0
        %1367 = vmatprep.subr.bf16.mxu0 0
        %1368 = vmatpush1.bf16.xpose.msra.mxu0 0
        %1369 = vmatprep.subr.bf16.mxu0 0
        %1370 = vmatpush1.bf16.xpose.msra.mxu0 0
        %1371 = vmatprep.subr.bf16.mxu0 0
        %1372 = vmatpush1.bf16.xpose.msra.mxu0 0
        %1373 = vmatprep.subr.bf16.mxu0 0
        %1374 = vmatpush1.bf16.xpose.msra.mxu0 0
        %1375 = vmatprep.subr.bf16.mxu0 0
        %1376 = vmatpush1.bf16.xpose.msra.mxu0 0
        %1377 = vmatprep.subr.bf16.mxu0 0
        %1378 = vmatpush1.bf16.xpose.msra.mxu0 0
        %1379 = vmatprep.mubr.bf16.mxu0 0
        %1380 = vmatmul.mubr.bf16.gmra.mrb[0].mxu0 %v1342
        %v1381 = vpop.f32.mrb[0].mxu0
        %v1382 = vadd.f32 %v1155, %v1381
        %v1383 = vpop.f32.mrb[0].mxu0
        %v1384 = vpop.f32.mrb[0].mxu0
        %v1385 = vpop.f32.mrb[0].mxu0
        %1386 = vdwg.mxu0
        %v1388 = vsel %vm1156, %v1144, 0
        %v1391 = vsel %vm1156, %v1152, 0
        %1393 = vmatprep.subr.bf16.mxu0 0
        %1394 = vmatpush1.bf16.xpose.msra.mxu0 %v1391
        %1395 = vmatprep.subr.bf16.mxu0 0
        %1396 = vmatpush1.bf16.xpose.msra.mxu0 0
        %1397 = vmatprep.subr.bf16.mxu0 0
        %1398 = vmatpush1.bf16.xpose.msra.mxu0 0
        %1399 = vmatprep.subr.bf16.mxu0 0
        %1400 = vmatpush1.bf16.xpose.msra.mxu0 0
        %1401 = vmatprep.subr.bf16.mxu0 0
        %1402 = vmatpush1.bf16.xpose.msra.mxu0 0
        %1403 = vmatprep.subr.bf16.mxu0 0
        %1404 = vmatpush1.bf16.xpose.msra.mxu0 0
        %1405 = vmatprep.subr.bf16.mxu0 0
        %1406 = vmatpush1.bf16.xpose.msra.mxu0 0
        %1407 = vmatprep.subr.bf16.mxu0 0
        %1408 = vmatpush1.bf16.xpose.msra.mxu0 0
        %1409 = vmatprep.subr.bf16.mxu0 0
        %1410 = vmatpush1.bf16.xpose.msra.mxu0 0
        %1411 = vmatprep.subr.bf16.mxu0 0
        %1412 = vmatpush1.bf16.xpose.msra.mxu0 0
        %1413 = vmatprep.subr.bf16.mxu0 0
        %1414 = vmatpush1.bf16.xpose.msra.mxu0 0
        %1415 = vmatprep.subr.bf16.mxu0 0
        %1416 = vmatpush1.bf16.xpose.msra.mxu0 0
        %1417 = vmatprep.subr.bf16.mxu0 0
        %1418 = vmatpush1.bf16.xpose.msra.mxu0 0
        %1419 = vmatprep.subr.bf16.mxu0 0
        %1420 = vmatpush1.bf16.xpose.msra.mxu0 0
        %1421 = vmatprep.subr.bf16.mxu0 0
        %1422 = vmatpush1.bf16.xpose.msra.mxu0 0
        %1423 = vmatprep.subr.bf16.mxu0 0
        %1424 = vmatpush1.bf16.xpose.msra.mxu0 0
        %1425 = vmatprep.mubr.bf16.mxu0 0
        %1426 = vmatmul.mubr.bf16.gmra.mrb[0].mxu0 %v1388
        %v1427 = vpop.f32.mrb[0].mxu0
        %v1428 = vadd.f32 %v1155, %v1427
        %v1429 = vpop.f32.mrb[0].mxu0
        %v1430 = vpop.f32.mrb[0].mxu0
        %v1431 = vpop.f32.mrb[0].mxu0
        %1432 = vdwg.mxu0
        %v1434 = vsel %vm1156, %v1145, 0
        %v1437 = vsel %vm1156, %v1153, 0
        %1439 = vmatprep.subr.bf16.mxu0 0
        %1440 = vmatpush1.bf16.xpose.msra.mxu0 %v1437
        %1441 = vmatprep.subr.bf16.mxu0 0
        %1442 = vmatpush1.bf16.xpose.msra.mxu0 0
        %1443 = vmatprep.subr.bf16.mxu0 0
        %1444 = vmatpush1.bf16.xpose.msra.mxu0 0
        %1445 = vmatprep.subr.bf16.mxu0 0
        %1446 = vmatpush1.bf16.xpose.msra.mxu0 0
        %1447 = vmatprep.subr.bf16.mxu0 0
        %1448 = vmatpush1.bf16.xpose.msra.mxu0 0
        %1449 = vmatprep.subr.bf16.mxu0 0
        %1450 = vmatpush1.bf16.xpose.msra.mxu0 0
        %1451 = vmatprep.subr.bf16.mxu0 0
        %1452 = vmatpush1.bf16.xpose.msra.mxu0 0
        %1453 = vmatprep.subr.bf16.mxu0 0
        %1454 = vmatpush1.bf16.xpose.msra.mxu0 0
        %1455 = vmatprep.subr.bf16.mxu0 0
        %1456 = vmatpush1.bf16.xpose.msra.mxu0 0
        %1457 = vmatprep.subr.bf16.mxu0 0
        %1458 = vmatpush1.bf16.xpose.msra.mxu0 0
        %1459 = vmatprep.subr.bf16.mxu0 0
        %1460 = vmatpush1.bf16.xpose.msra.mxu0 0
        %1461 = vmatprep.subr.bf16.mxu0 0
        %1462 = vmatpush1.bf16.xpose.msra.mxu0 0
        %1463 = vmatprep.subr.bf16.mxu0 0
        %1464 = vmatpush1.bf16.xpose.msra.mxu0 0
        %1465 = vmatprep.subr.bf16.mxu0 0
        %1466 = vmatpush1.bf16.xpose.msra.mxu0 0
        %1467 = vmatprep.subr.bf16.mxu0 0
        %1468 = vmatpush1.bf16.xpose.msra.mxu0 0
        %1469 = vmatprep.subr.bf16.mxu0 0
        %1470 = vmatpush1.bf16.xpose.msra.mxu0 0
        %1471 = vmatprep.mubr.bf16.mxu0 0
        %1472 = vmatmul.mubr.bf16.gmra.mrb[0].mxu0 %v1434
        %v1473 = vpop.f32.mrb[0].mxu0
        %v1474 = vadd.f32 %v1155, %v1473
        %v1475 = vpop.f32.mrb[0].mxu0
        %v1476 = vpop.f32.mrb[0].mxu0
        %v1477 = vpop.f32.mrb[0].mxu0
        %1478 = vdwg.mxu0
        %v1480 = vsel %vm1156, %v1146, 0
        %v1483 = vsel %vm1156, %v1154, 0
        %1485 = vmatprep.subr.bf16.mxu0 0
        %1486 = vmatpush1.bf16.xpose.msra.mxu0 %v1483
        %1487 = vmatprep.subr.bf16.mxu0 0
        %1488 = vmatpush1.bf16.xpose.msra.mxu0 0
        %1489 = vmatprep.subr.bf16.mxu0 0
        %1490 = vmatpush1.bf16.xpose.msra.mxu0 0
        %1491 = vmatprep.subr.bf16.mxu0 0
        %1492 = vmatpush1.bf16.xpose.msra.mxu0 0
        %1493 = vmatprep.subr.bf16.mxu0 0
        %1494 = vmatpush1.bf16.xpose.msra.mxu0 0
        %1495 = vmatprep.subr.bf16.mxu0 0
        %1496 = vmatpush1.bf16.xpose.msra.mxu0 0
        %1497 = vmatprep.subr.bf16.mxu0 0
        %1498 = vmatpush1.bf16.xpose.msra.mxu0 0
        %1499 = vmatprep.subr.bf16.mxu0 0
        %1500 = vmatpush1.bf16.xpose.msra.mxu0 0
        %1501 = vmatprep.subr.bf16.mxu0 0
        %1502 = vmatpush1.bf16.xpose.msra.mxu0 0
        %1503 = vmatprep.subr.bf16.mxu0 0
        %1504 = vmatpush1.bf16.xpose.msra.mxu0 0
        %1505 = vmatprep.subr.bf16.mxu0 0
        %1506 = vmatpush1.bf16.xpose.msra.mxu0 0
        %1507 = vmatprep.subr.bf16.mxu0 0
        %1508 = vmatpush1.bf16.xpose.msra.mxu0 0
        %1509 = vmatprep.subr.bf16.mxu0 0
        %1510 = vmatpush1.bf16.xpose.msra.mxu0 0
        %1511 = vmatprep.subr.bf16.mxu0 0
        %1512 = vmatpush1.bf16.xpose.msra.mxu0 0
        %1513 = vmatprep.subr.bf16.mxu0 0
        %1514 = vmatpush1.bf16.xpose.msra.mxu0 0
        %1515 = vmatprep.subr.bf16.mxu0 0
        %1516 = vmatpush1.bf16.xpose.msra.mxu0 0
        %1517 = vmatprep.mubr.bf16.mxu0 0
        %1518 = vmatmul.mubr.bf16.gmra.mrb[0].mxu0 %v1480
        %v1519 = vpop.f32.mrb[0].mxu0
        %v1520 = vadd.f32 %v1155, %v1519
        %v1521 = vpop.f32.mrb[0].mxu0
        %v1522 = vpop.f32.mrb[0].mxu0
        %v1523 = vpop.f32.mrb[0].mxu0
        %1524 = vdwg.mxu0
        %vm1525 = vcmask 64512
        %v1526 = vsel %vm1525, %v1198, -inf
        %1527 = vmax.xlane.f32.xlu0 %v1526
        %v1528 = vpop.xlane.xlu0 %1527
        %v1529 = vsel %vm1525, %v1244, -inf
        %1530 = vmax.xlane.f32.xlu0 %v1529
        %v1531 = vpop.xlane.xlu0 %1530
        %v1532 = vsel %vm1525, %v1290, -inf
        %1533 = vmax.xlane.f32.xlu0 %v1532
        %v1534 = vpop.xlane.xlu0 %1533
        %v1535 = vsel %vm1525, %v1336, -inf
        %1536 = vmax.xlane.f32.xlu0 %v1535
        %v1537 = vpop.xlane.xlu0 %1536
        %v1538 = vsel %vm1525, %v1382, -inf
        %1539 = vmax.xlane.f32.xlu0 %v1538
        %v1540 = vpop.xlane.xlu0 %1539
        %v1541 = vsel %vm1525, %v1428, -inf
        %1542 = vmax.xlane.f32.xlu0 %v1541
        %v1543 = vpop.xlane.xlu0 %1542
        %v1544 = vsel %vm1525, %v1474, -inf
        %1545 = vmax.xlane.f32.xlu0 %v1544
        %v1546 = vpop.xlane.xlu0 %1545
        %v1547 = vsel %vm1525, %v1520, -inf
        %1548 = vmax.xlane.f32.xlu0 %v1547
        %v1549 = vpop.xlane.xlu0 %1548
        %v1550 = vsub.f32 %v1198, %v1528
        %v1551 = vsub.f32 %v1244, %v1531
        %v1552 = vsub.f32 %v1290, %v1534
        %v1553 = vsub.f32 %v1336, %v1537
        %v1554 = vsub.f32 %v1382, %v1540
        %v1555 = vsub.f32 %v1428, %v1543
        %v1556 = vsub.f32 %v1474, %v1546
        %v1557 = vsub.f32 %v1520, %v1549
        %v1558 = vmul.f32 %v1550, 1.442695
        %v1559 = vpow.pop %v1558
        %v1560 = vmul.f32 %v1551, 1.442695
        %v1561 = vpow.pop %v1560
        %v1562 = vmul.f32 %v1552, 1.442695
        %v1563 = vpow.pop %v1562
        %v1564 = vmul.f32 %v1553, 1.442695
        %v1565 = vpow.pop %v1564
        %v1566 = vmul.f32 %v1554, 1.442695
        %v1567 = vpow.pop %v1566
        %v1568 = vmul.f32 %v1555, 1.442695
        %v1569 = vpow.pop %v1568
        %v1570 = vmul.f32 %v1556, 1.442695
        %v1571 = vpow.pop %v1570
        %v1572 = vmul.f32 %v1557, 1.442695
        %v1573 = vpow.pop %v1572
        %v1574 = vsel %vm1525, %v1559, 0.0
        %1575 = vadd.xlane.f32.xlu0 %v1574
        %v1576 = vpop.xlane.xlu0 %1575
        %v1577 = vsel %vm1525, %v1561, 0.0
        %1578 = vadd.xlane.f32.xlu0 %v1577
        %v1579 = vpop.xlane.xlu0 %1578
        %v1580 = vsel %vm1525, %v1563, 0.0
        %1581 = vadd.xlane.f32.xlu0 %v1580
        %v1582 = vpop.xlane.xlu0 %1581
        %v1583 = vsel %vm1525, %v1565, 0.0
        %1584 = vadd.xlane.f32.xlu0 %v1583
        %v1585 = vpop.xlane.xlu0 %1584
        %v1586 = vsel %vm1525, %v1567, 0.0
        %1587 = vadd.xlane.f32.xlu0 %v1586
        %v1588 = vpop.xlane.xlu0 %1587
        %v1589 = vsel %vm1525, %v1569, 0.0
        %1590 = vadd.xlane.f32.xlu0 %v1589
        %v1591 = vpop.xlane.xlu0 %1590
        %v1592 = vsel %vm1525, %v1571, 0.0
        %1593 = vadd.xlane.f32.xlu0 %v1592
        %v1594 = vpop.xlane.xlu0 %1593
        %v1595 = vsel %vm1525, %v1573, 0.0
        %1596 = vadd.xlane.f32.xlu0 %v1595
        %v1597 = vpop.xlane.xlu0 %1596
        %v1598 = vrcp.pop %v1576
        %v1599 = vmul.f32 %v1559, %v1598
        %v1600 = vrcp.pop %v1579
        %v1601 = vmul.f32 %v1561, %v1600
        %v1602 = vrcp.pop %v1582
        %v1603 = vmul.f32 %v1563, %v1602
        %v1604 = vrcp.pop %v1585
        %v1605 = vmul.f32 %v1565, %v1604
        %v1606 = vrcp.pop %v1588
        %v1607 = vmul.f32 %v1567, %v1606
        %v1608 = vrcp.pop %v1591
        %v1609 = vmul.f32 %v1569, %v1608
        %v1610 = vrcp.pop %v1594
        %v1611 = vmul.f32 %v1571, %v1610
        %v1612 = vrcp.pop %v1597
        %v1613 = vmul.f32 %v1573, %v1612
        %v1614 = vpack.c.bf16 %v1599, %v1599
        %v1615 = vpack.c.bf16 %v1601, %v1601
        %v1616 = vpack.c.bf16 %v1603, %v1603
        %v1617 = vpack.c.bf16 %v1605, %v1605
        %v1618 = vpack.c.bf16 %v1607, %v1607
        %v1619 = vpack.c.bf16 %v1609, %v1609
        %v1620 = vpack.c.bf16 %v1611, %v1611
        %v1621 = vpack.c.bf16 %v1613, %v1613
        %v1622 = vpack.c.bf16 %v1073, %v1073
        %v1623 = vpack.c.bf16 %v1076, %v1076
        %v1624 = vpack.c.bf16 %v1122, %v1122
        %v1625 = vpack.c.bf16 %v1124, %v1124
        %v1626 = vpack.c.bf16 %v1128, %v1128
        %v1627 = vpack.c.bf16 %v1130, %v1130
        %v1628 = vpack.c.bf16 %v1134, %v1134
        %v1629 = vpack.c.bf16 %v1136, %v1136
        %v1631 = vsel %vm1525, %v1614, 0
        %vm1633 = vcmask 1043456
        %v1635 = vsel %vm1633, %v1622, 0
        %1637 = vmatprep.subr.bf16.mxu0 0
        %1638 = vmatpush1.bf16.msra.mxu0 %v1635
        %1639 = vmatprep.subr.bf16.mxu0 0
        %1640 = vmatpush1.bf16.msra.mxu0 0
        %1641 = vmatprep.subr.bf16.mxu0 0
        %1642 = vmatpush1.bf16.msra.mxu0 0
        %1643 = vmatprep.subr.bf16.mxu0 0
        %1644 = vmatpush1.bf16.msra.mxu0 0
        %1645 = vmatprep.subr.bf16.mxu0 0
        %1646 = vmatpush1.bf16.msra.mxu0 0
        %1647 = vmatprep.subr.bf16.mxu0 0
        %1648 = vmatpush1.bf16.msra.mxu0 0
        %1649 = vmatprep.subr.bf16.mxu0 0
        %1650 = vmatpush1.bf16.msra.mxu0 0
        %1651 = vmatprep.subr.bf16.mxu0 0
        %1652 = vmatpush1.bf16.msra.mxu0 0
        %1653 = vmatprep.subr.bf16.mxu0 0
        %1654 = vmatpush1.bf16.msra.mxu0 0
        %1655 = vmatprep.subr.bf16.mxu0 0
        %1656 = vmatpush1.bf16.msra.mxu0 0
        %1657 = vmatprep.subr.bf16.mxu0 0
        %1658 = vmatpush1.bf16.msra.mxu0 0
        %1659 = vmatprep.subr.bf16.mxu0 0
        %1660 = vmatpush1.bf16.msra.mxu0 0
        %1661 = vmatprep.subr.bf16.mxu0 0
        %1662 = vmatpush1.bf16.msra.mxu0 0
        %1663 = vmatprep.subr.bf16.mxu0 0
        %1664 = vmatpush1.bf16.msra.mxu0 0
        %1665 = vmatprep.subr.bf16.mxu0 0
        %1666 = vmatpush1.bf16.msra.mxu0 0
        %1667 = vmatprep.subr.bf16.mxu0 0
        %1668 = vmatpush1.bf16.msra.mxu0 0
        %1669 = vmatprep.mubr.bf16.mxu0 0
        %1670 = vmatmul.mubr.bf16.gmra.mrb[0].mxu0 %v1631
        %v1671 = vpop.f32.mrb[0].mxu0
        %v1672 = vadd.f32 0.0, %v1671
        %v1673 = vpop.f32.mrb[0].mxu0
        %v1674 = vpop.f32.mrb[0].mxu0
        %v1675 = vpop.f32.mrb[0].mxu0
        %1676 = vdwg.mxu0
        %v1678 = vsel %vm1525, %v1615, 0
        %v1681 = vsel %vm1633, %v1623, 0
        %1683 = vmatprep.subr.bf16.mxu0 0
        %1684 = vmatpush1.bf16.msra.mxu0 %v1681
        %1685 = vmatprep.subr.bf16.mxu0 0
        %1686 = vmatpush1.bf16.msra.mxu0 0
        %1687 = vmatprep.subr.bf16.mxu0 0
        %1688 = vmatpush1.bf16.msra.mxu0 0
        %1689 = vmatprep.subr.bf16.mxu0 0
        %1690 = vmatpush1.bf16.msra.mxu0 0
        %1691 = vmatprep.subr.bf16.mxu0 0
        %1692 = vmatpush1.bf16.msra.mxu0 0
        %1693 = vmatprep.subr.bf16.mxu0 0
        %1694 = vmatpush1.bf16.msra.mxu0 0
        %1695 = vmatprep.subr.bf16.mxu0 0
        %1696 = vmatpush1.bf16.msra.mxu0 0
        %1697 = vmatprep.subr.bf16.mxu0 0
        %1698 = vmatpush1.bf16.msra.mxu0 0
        %1699 = vmatprep.subr.bf16.mxu0 0
        %1700 = vmatpush1.bf16.msra.mxu0 0
        %1701 = vmatprep.subr.bf16.mxu0 0
        %1702 = vmatpush1.bf16.msra.mxu0 0
        %1703 = vmatprep.subr.bf16.mxu0 0
        %1704 = vmatpush1.bf16.msra.mxu0 0
        %1705 = vmatprep.subr.bf16.mxu0 0
        %1706 = vmatpush1.bf16.msra.mxu0 0
        %1707 = vmatprep.subr.bf16.mxu0 0
        %1708 = vmatpush1.bf16.msra.mxu0 0
        %1709 = vmatprep.subr.bf16.mxu0 0
        %1710 = vmatpush1.bf16.msra.mxu0 0
        %1711 = vmatprep.subr.bf16.mxu0 0
        %1712 = vmatpush1.bf16.msra.mxu0 0
        %1713 = vmatprep.subr.bf16.mxu0 0
        %1714 = vmatpush1.bf16.msra.mxu0 0
        %1715 = vmatprep.mubr.bf16.mxu0 0
        %1716 = vmatmul.mubr.bf16.gmra.mrb[0].mxu0 %v1678
        %v1717 = vpop.f32.mrb[0].mxu0
        %v1718 = vadd.f32 0.0, %v1717
        %v1719 = vpop.f32.mrb[0].mxu0
        %v1720 = vpop.f32.mrb[0].mxu0
        %v1721 = vpop.f32.mrb[0].mxu0
        %1722 = vdwg.mxu0
        %v1724 = vsel %vm1525, %v1616, 0
        %v1727 = vsel %vm1633, %v1624, 0
        %1729 = vmatprep.subr.bf16.mxu0 0
        %1730 = vmatpush1.bf16.msra.mxu0 %v1727
        %1731 = vmatprep.subr.bf16.mxu0 0
        %1732 = vmatpush1.bf16.msra.mxu0 0
        %1733 = vmatprep.subr.bf16.mxu0 0
        %1734 = vmatpush1.bf16.msra.mxu0 0
        %1735 = vmatprep.subr.bf16.mxu0 0
        %1736 = vmatpush1.bf16.msra.mxu0 0
        %1737 = vmatprep.subr.bf16.mxu0 0
        %1738 = vmatpush1.bf16.msra.mxu0 0
        %1739 = vmatprep.subr.bf16.mxu0 0
        %1740 = vmatpush1.bf16.msra.mxu0 0
        %1741 = vmatprep.subr.bf16.mxu0 0
        %1742 = vmatpush1.bf16.msra.mxu0 0
        %1743 = vmatprep.subr.bf16.mxu0 0
        %1744 = vmatpush1.bf16.msra.mxu0 0
        %1745 = vmatprep.subr.bf16.mxu0 0
        %1746 = vmatpush1.bf16.msra.mxu0 0
        %1747 = vmatprep.subr.bf16.mxu0 0
        %1748 = vmatpush1.bf16.msra.mxu0 0
        %1749 = vmatprep.subr.bf16.mxu0 0
        %1750 = vmatpush1.bf16.msra.mxu0 0
        %1751 = vmatprep.subr.bf16.mxu0 0
        %1752 = vmatpush1.bf16.msra.mxu0 0
        %1753 = vmatprep.subr.bf16.mxu0 0
        %1754 = vmatpush1.bf16.msra.mxu0 0
        %1755 = vmatprep.subr.bf16.mxu0 0
        %1756 = vmatpush1.bf16.msra.mxu0 0
        %1757 = vmatprep.subr.bf16.mxu0 0
        %1758 = vmatpush1.bf16.msra.mxu0 0
        %1759 = vmatprep.subr.bf16.mxu0 0
        %1760 = vmatpush1.bf16.msra.mxu0 0
        %1761 = vmatprep.mubr.bf16.mxu0 0
        %1762 = vmatmul.mubr.bf16.gmra.mrb[0].mxu0 %v1724
        %v1763 = vpop.f32.mrb[0].mxu0
        %v1764 = vadd.f32 0.0, %v1763
        %v1765 = vpop.f32.mrb[0].mxu0
        %v1766 = vpop.f32.mrb[0].mxu0
        %v1767 = vpop.f32.mrb[0].mxu0
        %1768 = vdwg.mxu0
        %v1770 = vsel %vm1525, %v1617, 0
        %v1773 = vsel %vm1633, %v1625, 0
        %1775 = vmatprep.subr.bf16.mxu0 0
        %1776 = vmatpush1.bf16.msra.mxu0 %v1773
        %1777 = vmatprep.subr.bf16.mxu0 0
        %1778 = vmatpush1.bf16.msra.mxu0 0
        %1779 = vmatprep.subr.bf16.mxu0 0
        %1780 = vmatpush1.bf16.msra.mxu0 0
        %1781 = vmatprep.subr.bf16.mxu0 0
        %1782 = vmatpush1.bf16.msra.mxu0 0
        %1783 = vmatprep.subr.bf16.mxu0 0
        %1784 = vmatpush1.bf16.msra.mxu0 0
        %1785 = vmatprep.subr.bf16.mxu0 0
        %1786 = vmatpush1.bf16.msra.mxu0 0
        %1787 = vmatprep.subr.bf16.mxu0 0
        %1788 = vmatpush1.bf16.msra.mxu0 0
        %1789 = vmatprep.subr.bf16.mxu0 0
        %1790 = vmatpush1.bf16.msra.mxu0 0
        %1791 = vmatprep.subr.bf16.mxu0 0
        %1792 = vmatpush1.bf16.msra.mxu0 0
        %1793 = vmatprep.subr.bf16.mxu0 0
        %1794 = vmatpush1.bf16.msra.mxu0 0
        %1795 = vmatprep.subr.bf16.mxu0 0
        %1796 = vmatpush1.bf16.msra.mxu0 0
        %1797 = vmatprep.subr.bf16.mxu0 0
        %1798 = vmatpush1.bf16.msra.mxu0 0
        %1799 = vmatprep.subr.bf16.mxu0 0
        %1800 = vmatpush1.bf16.msra.mxu0 0
        %1801 = vmatprep.subr.bf16.mxu0 0
        %1802 = vmatpush1.bf16.msra.mxu0 0
        %1803 = vmatprep.subr.bf16.mxu0 0
        %1804 = vmatpush1.bf16.msra.mxu0 0
        %1805 = vmatprep.subr.bf16.mxu0 0
        %1806 = vmatpush1.bf16.msra.mxu0 0
        %1807 = vmatprep.mubr.bf16.mxu0 0
        %1808 = vmatmul.mubr.bf16.gmra.mrb[0].mxu0 %v1770
        %v1809 = vpop.f32.mrb[0].mxu0
        %v1810 = vadd.f32 0.0, %v1809
        %v1811 = vpop.f32.mrb[0].mxu0
        %v1812 = vpop.f32.mrb[0].mxu0
        %v1813 = vpop.f32.mrb[0].mxu0
        %1814 = vdwg.mxu0
        %v1816 = vsel %vm1525, %v1618, 0
        %v1819 = vsel %vm1633, %v1626, 0
        %1821 = vmatprep.subr.bf16.mxu0 0
        %1822 = vmatpush1.bf16.msra.mxu0 %v1819
        %1823 = vmatprep.subr.bf16.mxu0 0
        %1824 = vmatpush1.bf16.msra.mxu0 0
        %1825 = vmatprep.subr.bf16.mxu0 0
        %1826 = vmatpush1.bf16.msra.mxu0 0
        %1827 = vmatprep.subr.bf16.mxu0 0
        %1828 = vmatpush1.bf16.msra.mxu0 0
        %1829 = vmatprep.subr.bf16.mxu0 0
        %1830 = vmatpush1.bf16.msra.mxu0 0
        %1831 = vmatprep.subr.bf16.mxu0 0
        %1832 = vmatpush1.bf16.msra.mxu0 0
        %1833 = vmatprep.subr.bf16.mxu0 0
        %1834 = vmatpush1.bf16.msra.mxu0 0
        %1835 = vmatprep.subr.bf16.mxu0 0
        %1836 = vmatpush1.bf16.msra.mxu0 0
        %1837 = vmatprep.subr.bf16.mxu0 0
        %1838 = vmatpush1.bf16.msra.mxu0 0
        %1839 = vmatprep.subr.bf16.mxu0 0
        %1840 = vmatpush1.bf16.msra.mxu0 0
        %1841 = vmatprep.subr.bf16.mxu0 0
        %1842 = vmatpush1.bf16.msra.mxu0 0
        %1843 = vmatprep.subr.bf16.mxu0 0
        %1844 = vmatpush1.bf16.msra.mxu0 0
        %1845 = vmatprep.subr.bf16.mxu0 0
        %1846 = vmatpush1.bf16.msra.mxu0 0
        %1847 = vmatprep.subr.bf16.mxu0 0
        %1848 = vmatpush1.bf16.msra.mxu0 0
        %1849 = vmatprep.subr.bf16.mxu0 0
        %1850 = vmatpush1.bf16.msra.mxu0 0
        %1851 = vmatprep.subr.bf16.mxu0 0
        %1852 = vmatpush1.bf16.msra.mxu0 0
        %1853 = vmatprep.mubr.bf16.mxu0 0
        %1854 = vmatmul.mubr.bf16.gmra.mrb[0].mxu0 %v1816
        %v1855 = vpop.f32.mrb[0].mxu0
        %v1856 = vadd.f32 0.0, %v1855
        %v1857 = vpop.f32.mrb[0].mxu0
        %v1858 = vpop.f32.mrb[0].mxu0
        %v1859 = vpop.f32.mrb[0].mxu0
        %1860 = vdwg.mxu0
        %v1862 = vsel %vm1525, %v1619, 0
        %v1865 = vsel %vm1633, %v1627, 0
        %1867 = vmatprep.subr.bf16.mxu0 0
        %1868 = vmatpush1.bf16.msra.mxu0 %v1865
        %1869 = vmatprep.subr.bf16.mxu0 0
        %1870 = vmatpush1.bf16.msra.mxu0 0
        %1871 = vmatprep.subr.bf16.mxu0 0
        %1872 = vmatpush1.bf16.msra.mxu0 0
        %1873 = vmatprep.subr.bf16.mxu0 0
        %1874 = vmatpush1.bf16.msra.mxu0 0
        %1875 = vmatprep.subr.bf16.mxu0 0
        %1876 = vmatpush1.bf16.msra.mxu0 0
        %1877 = vmatprep.subr.bf16.mxu0 0
        %1878 = vmatpush1.bf16.msra.mxu0 0
        %1879 = vmatprep.subr.bf16.mxu0 0
        %1880 = vmatpush1.bf16.msra.mxu0 0
        %1881 = vmatprep.subr.bf16.mxu0 0
        %1882 = vmatpush1.bf16.msra.mxu0 0
        %1883 = vmatprep.subr.bf16.mxu0 0
        %1884 = vmatpush1.bf16.msra.mxu0 0
        %1885 = vmatprep.subr.bf16.mxu0 0
        %1886 = vmatpush1.bf16.msra.mxu0 0
        %1887 = vmatprep.subr.bf16.mxu0 0
        %1888 = vmatpush1.bf16.msra.mxu0 0
        %1889 = vmatprep.subr.bf16.mxu0 0
        %1890 = vmatpush1.bf16.msra.mxu0 0
        %1891 = vmatprep.subr.bf16.mxu0 0
        %1892 = vmatpush1.bf16.msra.mxu0 0
        %1893 = vmatprep.subr.bf16.mxu0 0
        %1894 = vmatpush1.bf16.msra.mxu0 0
        %1895 = vmatprep.subr.bf16.mxu0 0
        %1896 = vmatpush1.bf16.msra.mxu0 0
        %1897 = vmatprep.subr.bf16.mxu0 0
        %1898 = vmatpush1.bf16.msra.mxu0 0
        %1899 = vmatprep.mubr.bf16.mxu0 0
        %1900 = vmatmul.mubr.bf16.gmra.mrb[0].mxu0 %v1862
        %v1901 = vpop.f32.mrb[0].mxu0
        %v1902 = vadd.f32 0.0, %v1901
        %v1903 = vpop.f32.mrb[0].mxu0
        %v1904 = vpop.f32.mrb[0].mxu0
        %v1905 = vpop.f32.mrb[0].mxu0
        %1906 = vdwg.mxu0
        %v1908 = vsel %vm1525, %v1620, 0
        %v1911 = vsel %vm1633, %v1628, 0
        %1913 = vmatprep.subr.bf16.mxu0 0
        %1914 = vmatpush1.bf16.msra.mxu0 %v1911
        %1915 = vmatprep.subr.bf16.mxu0 0
        %1916 = vmatpush1.bf16.msra.mxu0 0
        %1917 = vmatprep.subr.bf16.mxu0 0
        %1918 = vmatpush1.bf16.msra.mxu0 0
        %1919 = vmatprep.subr.bf16.mxu0 0
        %1920 = vmatpush1.bf16.msra.mxu0 0
        %1921 = vmatprep.subr.bf16.mxu0 0
        %1922 = vmatpush1.bf16.msra.mxu0 0
        %1923 = vmatprep.subr.bf16.mxu0 0
        %1924 = vmatpush1.bf16.msra.mxu0 0
        %1925 = vmatprep.subr.bf16.mxu0 0
        %1926 = vmatpush1.bf16.msra.mxu0 0
        %1927 = vmatprep.subr.bf16.mxu0 0
        %1928 = vmatpush1.bf16.msra.mxu0 0
        %1929 = vmatprep.subr.bf16.mxu0 0
        %1930 = vmatpush1.bf16.msra.mxu0 0
        %1931 = vmatprep.subr.bf16.mxu0 0
        %1932 = vmatpush1.bf16.msra.mxu0 0
        %1933 = vmatprep.subr.bf16.mxu0 0
        %1934 = vmatpush1.bf16.msra.mxu0 0
        %1935 = vmatprep.subr.bf16.mxu0 0
        %1936 = vmatpush1.bf16.msra.mxu0 0
        %1937 = vmatprep.subr.bf16.mxu0 0
        %1938 = vmatpush1.bf16.msra.mxu0 0
        %1939 = vmatprep.subr.bf16.mxu0 0
        %1940 = vmatpush1.bf16.msra.mxu0 0
        %1941 = vmatprep.subr.bf16.mxu0 0
        %1942 = vmatpush1.bf16.msra.mxu0 0
        %1943 = vmatprep.subr.bf16.mxu0 0
        %1944 = vmatpush1.bf16.msra.mxu0 0
        %1945 = vmatprep.mubr.bf16.mxu0 0
        %1946 = vmatmul.mubr.bf16.gmra.mrb[0].mxu0 %v1908
        %v1947 = vpop.f32.mrb[0].mxu0
        %v1948 = vadd.f32 0.0, %v1947
        %v1949 = vpop.f32.mrb[0].mxu0
        %v1950 = vpop.f32.mrb[0].mxu0
        %v1951 = vpop.f32.mrb[0].mxu0
        %1952 = vdwg.mxu0
        %v1954 = vsel %vm1525, %v1621, 0
        %v1957 = vsel %vm1633, %v1629, 0
        %1959 = vmatprep.subr.bf16.mxu0 0
        %1960 = vmatpush1.bf16.msra.mxu0 %v1957
        %1961 = vmatprep.subr.bf16.mxu0 0
        %1962 = vmatpush1.bf16.msra.mxu0 0
        %1963 = vmatprep.subr.bf16.mxu0 0
        %1964 = vmatpush1.bf16.msra.mxu0 0
        %1965 = vmatprep.subr.bf16.mxu0 0
        %1966 = vmatpush1.bf16.msra.mxu0 0
        %1967 = vmatprep.subr.bf16.mxu0 0
        %1968 = vmatpush1.bf16.msra.mxu0 0
        %1969 = vmatprep.subr.bf16.mxu0 0
        %1970 = vmatpush1.bf16.msra.mxu0 0
        %1971 = vmatprep.subr.bf16.mxu0 0
        %1972 = vmatpush1.bf16.msra.mxu0 0
        %1973 = vmatprep.subr.bf16.mxu0 0
        %1974 = vmatpush1.bf16.msra.mxu0 0
        %1975 = vmatprep.subr.bf16.mxu0 0
        %1976 = vmatpush1.bf16.msra.mxu0 0
        %1977 = vmatprep.subr.bf16.mxu0 0
        %1978 = vmatpush1.bf16.msra.mxu0 0
        %1979 = vmatprep.subr.bf16.mxu0 0
        %1980 = vmatpush1.bf16.msra.mxu0 0
        %1981 = vmatprep.subr.bf16.mxu0 0
        %1982 = vmatpush1.bf16.msra.mxu0 0
        %1983 = vmatprep.subr.bf16.mxu0 0
        %1984 = vmatpush1.bf16.msra.mxu0 0
        %1985 = vmatprep.subr.bf16.mxu0 0
        %1986 = vmatpush1.bf16.msra.mxu0 0
        %1987 = vmatprep.subr.bf16.mxu0 0
        %1988 = vmatpush1.bf16.msra.mxu0 0
        %1989 = vmatprep.subr.bf16.mxu0 0
        %1990 = vmatpush1.bf16.msra.mxu0 0
        %1991 = vmatprep.mubr.bf16.mxu0 0
        %1992 = vmatmul.mubr.bf16.gmra.mrb[0].mxu0 %v1954
        %v1993 = vpop.f32.mrb[0].mxu0
        %v1994 = vadd.f32 0.0, %v1993
        %v1995 = vpop.f32.mrb[0].mxu0
        %v1996 = vpop.f32.mrb[0].mxu0
        %v1997 = vpop.f32.mrb[0].mxu0
        %1998 = vdwg.mxu0
        %2001 = vrot.lane.b32.xlu0 %v1764, 32
        %v2002 = vpop.permute.xlu0 %2001
        %2003 = vrot.lane.b32.xlu0 %v1810, 32
        %v2004 = vpop.permute.xlu0 %2003
        %2009 = vrot.lane.b32.xlu0 %v1856, 64
        %v2010 = vpop.permute.xlu0 %2009
        %2011 = vrot.lane.b32.xlu0 %v1902, 64
        %v2012 = vpop.permute.xlu0 %2011
        %2017 = vrot.lane.b32.xlu0 %v1948, 96
        %v2018 = vpop.permute.xlu0 %2017
        %2019 = vrot.lane.b32.xlu0 %v1994, 96
        %v2020 = vpop.permute.xlu0 %2019
        %v2023 = vsel %vm1156, %v1672, %v2002
        %v2024 = vsel %vm1156, %v1718, %v2004
        %vm2025 = vcmask 523264
        %v2026 = vsel %vm2025, %v2023, %v2010
        %v2027 = vsel %vm2025, %v2024, %v2012
        %vm2028 = vcmask 785408
        %v2029 = vsel %vm2028, %v2026, %v2018
        %v2030 = vsel %vm2028, %v2027, %v2020
        %v2031 = vpack.c.bf16 %v2030, %v2029
        %v2032 = vld [vmem:[%s626] sm:$0xf]
        %v2033 = vld [vmem:[%s626 + $0x4] sm:$0xf]
        %v2034 = vld [vmem:[%s626 + $0x8] sm:$0xf]
        %v2035 = vld [vmem:[%s626 + $0xc] sm:$0xf]
        %v2036 = vld [vmem:[%s626 + $0x10] sm:$0xf]
        %v2037 = vld [vmem:[%s626 + $0x14] sm:$0xf]
        %v2038 = vld [vmem:[%s626 + $0x18] sm:$0xf]
        %v2039 = vld [vmem:[%s626 + $0x1c] sm:$0xf]
        %v2040 = vld [vmem:[%s626 + $0x20] sm:$0xf]
        %v2041 = vld [vmem:[%s626 + $0x24] sm:$0xf]
        %v2042 = vld [vmem:[%s626 + $0x28] sm:$0xf]
        %v2043 = vld [vmem:[%s626 + $0x2c] sm:$0xf]
        %v2044 = vld [vmem:[%s626 + $0x30] sm:$0xf]
        %v2045 = vld [vmem:[%s626 + $0x34] sm:$0xf]
        %v2046 = vld [vmem:[%s626 + $0x38] sm:$0xf]
        %v2047 = vld [vmem:[%s626 + $0x3c] sm:$0xf]
        %v2048 = vld [vmem:[%s733] sm:$0x1]
        %v2050 = vlaneseq
        %v2051 = vshrl.u32 %v2050, 7
        %v2052 = vsub.s32 0, %v2051
        %v2053 = vrot.slane %v2048, %v2052
        %v2071 = vunpack.c.l.b16 %v2032
        %v2072 = vunpack.c.l.b16 %v2033
        %v2073 = vunpack.c.l.b16 %v2034
        %v2074 = vunpack.c.l.b16 %v2035
        %v2075 = vunpack.c.l.b16 %v2036
        %v2076 = vunpack.c.l.b16 %v2037
        %v2077 = vunpack.c.l.b16 %v2038
        %v2078 = vunpack.c.l.b16 %v2039
        %v2079 = vunpack.c.l.b16 %v2040
        %v2080 = vunpack.c.l.b16 %v2041
        %v2081 = vunpack.c.l.b16 %v2042
        %v2082 = vunpack.c.l.b16 %v2043
        %v2083 = vunpack.c.l.b16 %v2044
        %v2084 = vunpack.c.l.b16 %v2045
        %v2085 = vunpack.c.l.b16 %v2046
        %v2086 = vunpack.c.l.b16 %v2047
        %v2087 = vpack.c.b16 %v2072, %v2071
        %v2088 = vpack.c.b16 %v2074, %v2073
        %v2089 = vpack.c.b16 %v2076, %v2075
        %v2090 = vpack.c.b16 %v2078, %v2077
        %v2091 = vpack.c.b16 %v2080, %v2079
        %v2092 = vpack.c.b16 %v2082, %v2081
        %v2093 = vpack.c.b16 %v2084, %v2083
        %v2094 = vpack.c.b16 %v2086, %v2085
        %2103 = vmatprep.subr.bf16.mxu0 0
        %2104 = vmatpush1.bf16.msra.mxu0 %v2087
        %2105 = vmatprep.subr.bf16.mxu0 0
        %2106 = vmatpush1.bf16.msra.mxu0 %v2088
        %2107 = vmatprep.subr.bf16.mxu0 0
        %2108 = vmatpush1.bf16.msra.mxu0 %v2089
        %2109 = vmatprep.subr.bf16.mxu0 0
        %2110 = vmatpush1.bf16.msra.mxu0 %v2090
        %2111 = vmatprep.subr.bf16.mxu0 0
        %2112 = vmatpush1.bf16.msra.mxu0 %v2091
        %2113 = vmatprep.subr.bf16.mxu0 0
        %2114 = vmatpush1.bf16.msra.mxu0 %v2092
        %2115 = vmatprep.subr.bf16.mxu0 0
        %2116 = vmatpush1.bf16.msra.mxu0 %v2093
        %2117 = vmatprep.subr.bf16.mxu0 0
        %2118 = vmatpush1.bf16.msra.mxu0 %v2094
        %2119 = vmatprep.subr.bf16.mxu0 0
        %2120 = vmatpush1.bf16.msra.mxu0 0
        %2121 = vmatprep.subr.bf16.mxu0 0
        %2122 = vmatpush1.bf16.msra.mxu0 0
        %2123 = vmatprep.subr.bf16.mxu0 0
        %2124 = vmatpush1.bf16.msra.mxu0 0
        %2125 = vmatprep.subr.bf16.mxu0 0
        %2126 = vmatpush1.bf16.msra.mxu0 0
        %2127 = vmatprep.subr.bf16.mxu0 0
        %2128 = vmatpush1.bf16.msra.mxu0 0
        %2129 = vmatprep.subr.bf16.mxu0 0
        %2130 = vmatpush1.bf16.msra.mxu0 0
        %2131 = vmatprep.subr.bf16.mxu0 0
        %2132 = vmatpush1.bf16.msra.mxu0 0
        %2133 = vmatprep.subr.bf16.mxu0 0
        %2134 = vmatpush1.bf16.msra.mxu0 0
        %2135 = vmatprep.mubr.bf16.mxu0 0
        %2136 = vmatmul.mubr.bf16.gmra.mrb[0].mxu0 %v2031
        %v2137 = vpop.f32.mrb[0].mxu0
        %v2138 = vadd.f32 %v2053, %v2137
        %v2139 = vpop.f32.mrb[0].mxu0
        %v2140 = vpop.f32.mrb[0].mxu0
        %v2141 = vadd.f32 %v2053, %v2140
        %v2142 = vpop.f32.mrb[0].mxu0
        %2143 = vdwg.mxu0
        %v2144 = vadd.f32 %v774, %v2138
        %v2145 = vadd.f32 %v775, %v2141
        %v2146 = vld [vmem:[%s736] sm:$0x1]
        %v2147 = vld [vmem:[%s739] sm:$0x1]
        %2148 = vadd.xlane.f32.xlu0 %v2144
        %v2149 = vpop.xlane.xlu0 %2148
        %2150 = vadd.xlane.f32.xlu0 %v2145
        %v2151 = vpop.xlane.xlu0 %2150
        %v2152 = vmul.f32 %v2149, %v782
        %v2153 = vmul.f32 %v2151, %v782
        %v2154 = vsub.f32 %v2144, %v2152
        %v2155 = vsub.f32 %v2145, %v2153
        %v2156 = vmul.f32 %v2154, %v2154
        %v2157 = vmul.f32 %v2155, %v2155
        %2158 = vadd.xlane.f32.xlu0 %v2156
        %v2159 = vpop.xlane.xlu0 %2158
        %2160 = vadd.xlane.f32.xlu0 %v2157
        %v2161 = vpop.xlane.xlu0 %2160
        %v2162 = vmul.f32 %v2159, %v782
        %v2163 = vmul.f32 %v2161, %v782
        %v2164 = vadd.f32 %v2162, 1e-05
        %v2165 = vadd.f32 %v2163, 1e-05
        %v2166 = vrsqrt.pop %v2164
        %v2167 = vrsqrt.pop %v2165
        %v2168 = vmul.f32 %v2154, %v2166
        %v2169 = vmul.f32 %v2155, %v2167
        %v2171 = vlaneseq
        %v2172 = vshrl.u32 %v2171, 7
        %v2173 = vsub.s32 0, %v2172
        %v2174 = vrot.slane %v2146, %v2173
        %v2176 = vmul.f32 %v2168, %v2174
        %v2177 = vmul.f32 %v2169, %v2174
        %v2179 = vlaneseq
        %v2180 = vshrl.u32 %v2179, 7
        %v2181 = vsub.s32 0, %v2180
        %v2182 = vrot.slane %v2147, %v2181
        %v2184 = vadd.f32 %v2176, %v2182
        %v2185 = vadd.f32 %v2177, %v2182
        %v2186 = vpack.c.bf16 %v2185, %v2184
        %v2187 = vld [vmem:[%s635] sm:$0xff]
        %v2188 = vld [vmem:[%s635 + $0x8] sm:$0xff]
        %v2189 = vld [vmem:[%s635 + $0x10] sm:$0xff]
        %v2190 = vld [vmem:[%s635 + $0x18] sm:$0xff]
        %v2191 = vld [vmem:[%s635 + $0x20] sm:$0xff]
        %v2192 = vld [vmem:[%s635 + $0x28] sm:$0xff]
        %v2193 = vld [vmem:[%s635 + $0x30] sm:$0xff]
        %v2194 = vld [vmem:[%s635 + $0x38] sm:$0xff]
        %v2195 = vld [vmem:[%s635 + $0x40] sm:$0xff]
        %v2196 = vld [vmem:[%s635 + $0x48] sm:$0xff]
        %v2197 = vld [vmem:[%s635 + $0x50] sm:$0xff]
        %v2198 = vld [vmem:[%s635 + $0x58] sm:$0xff]
        %v2199 = vld [vmem:[%s635 + $0x60] sm:$0xff]
        %v2200 = vld [vmem:[%s635 + $0x68] sm:$0xff]
        %v2201 = vld [vmem:[%s635 + $0x70] sm:$0xff]
        %v2202 = vld [vmem:[%s635 + $0x78] sm:$0xff]
        %v2203 = vld [vmem:[%s743] sm:$0x3]
        %v2205 = vlaneseq
        %v2206 = vshrl.u32 %v2205, 7
        %v2207 = vsub.s32 0, %v2206
        %v2208 = vrot.slane %v2203, %v2207
        %v2209 = vlaneseq
        %v2210 = vshrl.u32 %v2209, 7
        %v2211 = vsub.s32 1, %v2210
        %v2212 = vrot.slane %v2203, %v2211
        %v2231 = vunpack.c.l.b16 %v2187
        %v2232 = vunpack.c.h.b16 %v2187
        %v2233 = vunpack.c.l.b16 %v2188
        %v2234 = vunpack.c.h.b16 %v2188
        %v2235 = vunpack.c.l.b16 %v2189
        %v2236 = vunpack.c.h.b16 %v2189
        %v2237 = vunpack.c.l.b16 %v2190
        %v2238 = vunpack.c.h.b16 %v2190
        %v2239 = vunpack.c.l.b16 %v2191
        %v2240 = vunpack.c.h.b16 %v2191
        %v2241 = vunpack.c.l.b16 %v2192
        %v2242 = vunpack.c.h.b16 %v2192
        %v2243 = vunpack.c.l.b16 %v2193
        %v2244 = vunpack.c.h.b16 %v2193
        %v2245 = vunpack.c.l.b16 %v2194
        %v2246 = vunpack.c.h.b16 %v2194
        %v2247 = vunpack.c.l.b16 %v2195
        %v2248 = vunpack.c.h.b16 %v2195
        %v2249 = vunpack.c.l.b16 %v2196
        %v2250 = vunpack.c.h.b16 %v2196
        %v2251 = vunpack.c.l.b16 %v2197
        %v2252 = vunpack.c.h.b16 %v2197
        %v2253 = vunpack.c.l.b16 %v2198
        %v2254 = vunpack.c.h.b16 %v2198
        %v2255 = vunpack.c.l.b16 %v2199
        %v2256 = vunpack.c.h.b16 %v2199
        %v2257 = vunpack.c.l.b16 %v2200
        %v2258 = vunpack.c.h.b16 %v2200
        %v2259 = vunpack.c.l.b16 %v2201
        %v2260 = vunpack.c.h.b16 %v2201
        %v2261 = vunpack.c.l.b16 %v2202
        %v2262 = vunpack.c.h.b16 %v2202
        %v2263 = vpack.c.b16 %v2233, %v2231
        %v2264 = vpack.c.b16 %v2234, %v2232
        %v2265 = vpack.c.b16 %v2237, %v2235
        %v2266 = vpack.c.b16 %v2238, %v2236
        %v2267 = vpack.c.b16 %v2241, %v2239
        %v2268 = vpack.c.b16 %v2242, %v2240
        %v2269 = vpack.c.b16 %v2245, %v2243
        %v2270 = vpack.c.b16 %v2246, %v2244
        %v2271 = vpack.c.b16 %v2249, %v2247
        %v2272 = vpack.c.b16 %v2250, %v2248
        %v2273 = vpack.c.b16 %v2253, %v2251
        %v2274 = vpack.c.b16 %v2254, %v2252
        %v2275 = vpack.c.b16 %v2257, %v2255
        %v2276 = vpack.c.b16 %v2258, %v2256
        %v2277 = vpack.c.b16 %v2261, %v2259
        %v2278 = vpack.c.b16 %v2262, %v2260
        %2295 = vmatprep.subr.bf16.mxu0 %v2264
        %2296 = vmatpush1.bf16.msra.mxu0 %v2263
        %2297 = vmatprep.subr.bf16.mxu0 %v2266
        %2298 = vmatpush1.bf16.msra.mxu0 %v2265
        %2299 = vmatprep.subr.bf16.mxu0 %v2268
        %2300 = vmatpush1.bf16.msra.mxu0 %v2267
        %2301 = vmatprep.subr.bf16.mxu0 %v2270
        %2302 = vmatpush1.bf16.msra.mxu0 %v2269
        %2303 = vmatprep.subr.bf16.mxu0 %v2272
        %2304 = vmatpush1.bf16.msra.mxu0 %v2271
        %2305 = vmatprep.subr.bf16.mxu0 %v2274
        %2306 = vmatpush1.bf16.msra.mxu0 %v2273
        %2307 = vmatprep.subr.bf16.mxu0 %v2276
        %2308 = vmatpush1.bf16.msra.mxu0 %v2275
        %2309 = vmatprep.subr.bf16.mxu0 %v2278
        %2310 = vmatpush1.bf16.msra.mxu0 %v2277
        %2311 = vmatprep.subr.bf16.mxu0 0
        %2312 = vmatpush1.bf16.msra.mxu0 0
        %2313 = vmatprep.subr.bf16.mxu0 0
        %2314 = vmatpush1.bf16.msra.mxu0 0
        %2315 = vmatprep.subr.bf16.mxu0 0
        %2316 = vmatpush1.bf16.msra.mxu0 0
        %2317 = vmatprep.subr.bf16.mxu0 0
        %2318 = vmatpush1.bf16.msra.mxu0 0
        %2319 = vmatprep.subr.bf16.mxu0 0
        %2320 = vmatpush1.bf16.msra.mxu0 0
        %2321 = vmatprep.subr.bf16.mxu0 0
        %2322 = vmatpush1.bf16.msra.mxu0 0
        %2323 = vmatprep.subr.bf16.mxu0 0
        %2324 = vmatpush1.bf16.msra.mxu0 0
        %2325 = vmatprep.subr.bf16.mxu0 0
        %2326 = vmatpush1.bf16.msra.mxu0 0
        %2327 = vmatprep.mubr.bf16.mxu0 0
        %2328 = vmatmul.mubr.bf16.gmra.mrb[0].mxu0 %v2186
        %v2329 = vpop.f32.mrb[0].mxu0
        %v2330 = vadd.f32 %v2208, %v2329
        %v2331 = vpop.f32.mrb[0].mxu0
        %v2332 = vadd.f32 %v2212, %v2331
        %v2333 = vpop.f32.mrb[0].mxu0
        %v2334 = vadd.f32 %v2208, %v2333
        %v2335 = vpop.f32.mrb[0].mxu0
        %v2336 = vadd.f32 %v2212, %v2335
        %2337 = vdwg.mxu0
        %v2338 = vmul.f32 %v2330, 1.702
        %v2339 = vmul.f32 %v2332, 1.702
        %v2340 = vmul.f32 %v2334, 1.702
        %v2341 = vmul.f32 %v2336, 1.702
        %v2342 = vxor.u32 %v2338, 2147483648
        %v2343 = vxor.u32 %v2339, 2147483648
        %v2344 = vxor.u32 %v2340, 2147483648
        %v2345 = vxor.u32 %v2341, 2147483648
        %v2346 = vmul.f32 %v2342, 1.442695
        %v2347 = vpow.pop %v2346
        %v2348 = vmul.f32 %v2343, 1.442695
        %v2349 = vpow.pop %v2348
        %v2350 = vmul.f32 %v2344, 1.442695
        %v2351 = vpow.pop %v2350
        %v2352 = vmul.f32 %v2345, 1.442695
        %v2353 = vpow.pop %v2352
        %v2354 = vadd.f32 %v2347, 1.0
        %v2355 = vadd.f32 %v2349, 1.0
        %v2356 = vadd.f32 %v2351, 1.0
        %v2357 = vadd.f32 %v2353, 1.0
        %v2358 = vrcp.pop %v2354
        %v2359 = vmul.f32 1.0, %v2358
        %v2360 = vrcp.pop %v2355
        %v2361 = vmul.f32 1.0, %v2360
        %v2362 = vrcp.pop %v2356
        %v2363 = vmul.f32 1.0, %v2362
        %v2364 = vrcp.pop %v2357
        %v2365 = vmul.f32 1.0, %v2364
        %v2366 = vmul.f32 %v2330, %v2359
        %v2367 = vmul.f32 %v2332, %v2361
        %v2368 = vmul.f32 %v2334, %v2363
        %v2369 = vmul.f32 %v2336, %v2365
        %v2370 = vpack.c.bf16 %v2368, %v2366
        %v2371 = vpack.c.bf16 %v2369, %v2367
        %v2372 = vld [vmem:[%s644] sm:$0xf]
        %v2373 = vld [vmem:[%s644 + $0x4] sm:$0xf]
        %v2374 = vld [vmem:[%s644 + $0x8] sm:$0xf]
        %v2375 = vld [vmem:[%s644 + $0xc] sm:$0xf]
        %v2376 = vld [vmem:[%s644 + $0x10] sm:$0xf]
        %v2377 = vld [vmem:[%s644 + $0x14] sm:$0xf]
        %v2378 = vld [vmem:[%s644 + $0x18] sm:$0xf]
        %v2379 = vld [vmem:[%s644 + $0x1c] sm:$0xf]
        %v2380 = vld [vmem:[%s644 + $0x20] sm:$0xf]
        %v2381 = vld [vmem:[%s644 + $0x24] sm:$0xf]
        %v2382 = vld [vmem:[%s644 + $0x28] sm:$0xf]
        %v2383 = vld [vmem:[%s644 + $0x2c] sm:$0xf]
        %v2384 = vld [vmem:[%s644 + $0x30] sm:$0xf]
        %v2385 = vld [vmem:[%s644 + $0x34] sm:$0xf]
        %v2386 = vld [vmem:[%s644 + $0x38] sm:$0xf]
        %v2387 = vld [vmem:[%s644 + $0x3c] sm:$0xf]
        %v2388 = vld [vmem:[%s644 + $0x40] sm:$0xf]
        %v2389 = vld [vmem:[%s644 + $0x44] sm:$0xf]
        %v2390 = vld [vmem:[%s644 + $0x48] sm:$0xf]
        %v2391 = vld [vmem:[%s644 + $0x4c] sm:$0xf]
        %v2392 = vld [vmem:[%s644 + $0x50] sm:$0xf]
        %v2393 = vld [vmem:[%s644 + $0x54] sm:$0xf]
        %v2394 = vld [vmem:[%s644 + $0x58] sm:$0xf]
        %v2395 = vld [vmem:[%s644 + $0x5c] sm:$0xf]
        %v2396 = vld [vmem:[%s644 + $0x60] sm:$0xf]
        %v2397 = vld [vmem:[%s644 + $0x64] sm:$0xf]
        %v2398 = vld [vmem:[%s644 + $0x68] sm:$0xf]
        %v2399 = vld [vmem:[%s644 + $0x6c] sm:$0xf]
        %v2400 = vld [vmem:[%s644 + $0x70] sm:$0xf]
        %v2401 = vld [vmem:[%s644 + $0x74] sm:$0xf]
        %v2402 = vld [vmem:[%s644 + $0x78] sm:$0xf]
        %v2403 = vld [vmem:[%s644 + $0x7c] sm:$0xf]
        %v2404 = vld [vmem:[%s746] sm:$0x1]
        %v2406 = vlaneseq
        %v2407 = vshrl.u32 %v2406, 7
        %v2408 = vsub.s32 0, %v2407
        %v2409 = vrot.slane %v2404, %v2408
        %v2443 = vunpack.c.l.b16 %v2372
        %v2444 = vunpack.c.l.b16 %v2373
        %v2445 = vunpack.c.l.b16 %v2374
        %v2446 = vunpack.c.l.b16 %v2375
        %v2447 = vunpack.c.l.b16 %v2376
        %v2448 = vunpack.c.l.b16 %v2377
        %v2449 = vunpack.c.l.b16 %v2378
        %v2450 = vunpack.c.l.b16 %v2379
        %v2451 = vunpack.c.l.b16 %v2380
        %v2452 = vunpack.c.l.b16 %v2381
        %v2453 = vunpack.c.l.b16 %v2382
        %v2454 = vunpack.c.l.b16 %v2383
        %v2455 = vunpack.c.l.b16 %v2384
        %v2456 = vunpack.c.l.b16 %v2385
        %v2457 = vunpack.c.l.b16 %v2386
        %v2458 = vunpack.c.l.b16 %v2387
        %v2459 = vunpack.c.l.b16 %v2388
        %v2460 = vunpack.c.l.b16 %v2389
        %v2461 = vunpack.c.l.b16 %v2390
        %v2462 = vunpack.c.l.b16 %v2391
        %v2463 = vunpack.c.l.b16 %v2392
        %v2464 = vunpack.c.l.b16 %v2393
        %v2465 = vunpack.c.l.b16 %v2394
        %v2466 = vunpack.c.l.b16 %v2395
        %v2467 = vunpack.c.l.b16 %v2396
        %v2468 = vunpack.c.l.b16 %v2397
        %v2469 = vunpack.c.l.b16 %v2398
        %v2470 = vunpack.c.l.b16 %v2399
        %v2471 = vunpack.c.l.b16 %v2400
        %v2472 = vunpack.c.l.b16 %v2401
        %v2473 = vunpack.c.l.b16 %v2402
        %v2474 = vunpack.c.l.b16 %v2403
        %v2475 = vpack.c.b16 %v2444, %v2443
        %v2476 = vpack.c.b16 %v2446, %v2445
        %v2477 = vpack.c.b16 %v2448, %v2447
        %v2478 = vpack.c.b16 %v2450, %v2449
        %v2479 = vpack.c.b16 %v2452, %v2451
        %v2480 = vpack.c.b16 %v2454, %v2453
        %v2481 = vpack.c.b16 %v2456, %v2455
        %v2482 = vpack.c.b16 %v2458, %v2457
        %v2483 = vpack.c.b16 %v2460, %v2459
        %v2484 = vpack.c.b16 %v2462, %v2461
        %v2485 = vpack.c.b16 %v2464, %v2463
        %v2486 = vpack.c.b16 %v2466, %v2465
        %v2487 = vpack.c.b16 %v2468, %v2467
        %v2488 = vpack.c.b16 %v2470, %v2469
        %v2489 = vpack.c.b16 %v2472, %v2471
        %v2490 = vpack.c.b16 %v2474, %v2473
        %2507 = vmatprep.subr.bf16.mxu0 0
        %2508 = vmatpush1.bf16.msra.mxu0 %v2475
        %2509 = vmatprep.subr.bf16.mxu0 0
        %2510 = vmatpush1.bf16.msra.mxu0 %v2476
        %2511 = vmatprep.subr.bf16.mxu0 0
        %2512 = vmatpush1.bf16.msra.mxu0 %v2477
        %2513 = vmatprep.subr.bf16.mxu0 0
        %2514 = vmatpush1.bf16.msra.mxu0 %v2478
        %2515 = vmatprep.subr.bf16.mxu0 0
        %2516 = vmatpush1.bf16.msra.mxu0 %v2479
        %2517 = vmatprep.subr.bf16.mxu0 0
        %2518 = vmatpush1.bf16.msra.mxu0 %v2480
        %2519 = vmatprep.subr.bf16.mxu0 0
        %2520 = vmatpush1.bf16.msra.mxu0 %v2481
        %2521 = vmatprep.subr.bf16.mxu0 0
        %2522 = vmatpush1.bf16.msra.mxu0 %v2482
        %2523 = vmatprep.subr.bf16.mxu0 0
        %2524 = vmatpush1.bf16.msra.mxu0 %v2483
        %2525 = vmatprep.subr.bf16.mxu0 0
        %2526 = vmatpush1.bf16.msra.mxu0 %v2484
        %2527 = vmatprep.subr.bf16.mxu0 0
        %2528 = vmatpush1.bf16.msra.mxu0 %v2485
        %2529 = vmatprep.subr.bf16.mxu0 0
        %2530 = vmatpush1.bf16.msra.mxu0 %v2486
        %2531 = vmatprep.subr.bf16.mxu0 0
        %2532 = vmatpush1.bf16.msra.mxu0 %v2487
        %2533 = vmatprep.subr.bf16.mxu0 0
        %2534 = vmatpush1.bf16.msra.mxu0 %v2488
        %2535 = vmatprep.subr.bf16.mxu0 0
        %2536 = vmatpush1.bf16.msra.mxu0 %v2489
        %2537 = vmatprep.subr.bf16.mxu0 0
        %2538 = vmatpush1.bf16.msra.mxu0 %v2490
        %2539 = vmatprep.mubr.bf16.mxu0 %v2371
        %2540 = vmatmul.mubr.bf16.gmra.mrb[0].mxu0 %v2370
        %v2541 = vpop.f32.mrb[0].mxu0
        %v2542 = vadd.f32 %v2409, %v2541
        %v2543 = vpop.f32.mrb[0].mxu0
        %v2544 = vpop.f32.mrb[0].mxu0
        %v2545 = vadd.f32 %v2409, %v2544
        %v2546 = vpop.f32.mrb[0].mxu0
        %2547 = vdwg.mxu0
        %v2548 = vadd.f32 %v2144, %v2542
        %v2549 = vadd.f32 %v2145, %v2545
        %2550 = vst [vmem:[#allocation15] sm:$0xff] %v2548
        %2551 = vst [vmem:[#allocation15 + $0x8] sm:$0xff] %v2549
        %p2552 = scmp.eq.s32.totalorder %s39, 1
        // Predicated region
        $region109: #{tpu_custom_call.1} parent=75 // pred_check
          %p2553 = pneg %p2552
        $region110: #{tpu_custom_call.1} parent=75 // pred_check_branch
          %2555 = sbr.rel (%p2553) target = $region112
        $region111: #{tpu_custom_call.1} parent=75 // pred_region
          %v2556 = vld [vmem:[%s13] sm:$0x1]
          %v2557 = vld [vmem:[%s14] sm:$0x1]
          %2558 = vadd.xlane.f32.xlu0 %v2548
          %v2559 = vpop.xlane.xlu0 %2558
          %2560 = vadd.xlane.f32.xlu0 %v2549
          %v2561 = vpop.xlane.xlu0 %2560
          %v2562 = vmul.f32 %v2559, %v782
          %v2563 = vmul.f32 %v2561, %v782
          %v2564 = vsub.f32 %v2548, %v2562
          %v2565 = vsub.f32 %v2549, %v2563
          %v2566 = vmul.f32 %v2564, %v2564
          %v2567 = vmul.f32 %v2565, %v2565
          %2568 = vadd.xlane.f32.xlu0 %v2566
          %v2569 = vpop.xlane.xlu0 %2568
          %2570 = vadd.xlane.f32.xlu0 %v2567
          %v2571 = vpop.xlane.xlu0 %2570
          %v2572 = vmul.f32 %v2569, %v782
          %v2573 = vmul.f32 %v2571, %v782
          %v2574 = vadd.f32 %v2572, 1e-05
          %v2575 = vadd.f32 %v2573, 1e-05
          %v2576 = vrsqrt.pop %v2574
          %v2577 = vrsqrt.pop %v2575
          %v2578 = vmul.f32 %v2564, %v2576
          %v2579 = vmul.f32 %v2565, %v2577
          %v2581 = vlaneseq
          %v2582 = vshrl.u32 %v2581, 7
          %v2583 = vsub.s32 0, %v2582
          %v2584 = vrot.slane %v2556, %v2583
          %v2586 = vmul.f32 %v2578, %v2584
          %v2587 = vmul.f32 %v2579, %v2584
          %v2589 = vlaneseq
          %v2590 = vshrl.u32 %v2589, 7
          %v2591 = vsub.s32 0, %v2590
          %v2592 = vrot.slane %v2557, %v2591
          %v2594 = vadd.f32 %v2586, %v2592
          %v2595 = vadd.f32 %v2587, %v2592
          %2596 = vst [vmem:[#allocation15] sm:$0xff] %v2594
          %2597 = vst [vmem:[#allocation15 + $0x8] sm:$0xff] %v2595
        $region112: #{tpu_custom_call.1} parent=75 // pred_fallthru
          _
        // Predicated region
        $region113: #{tpu_custom_call.1} parent=75 // pred_check
          %p2598 = pneg %p406
        $region114: #{tpu_custom_call.1} parent=75 // pred_check_branch
          %2600 = sbr.rel (%p2598) target = $region116
        $region115: #{tpu_custom_call.1} parent=75 // pred_region
          %s2602 = ssub.s32 256, 256
          %2603 = vsyncadd [#allocation6], %s2602
          %s2604 = sshll.u32 [#allocation15], 4
          %s2605 = int_to_ptr.vmem [resolvable:$true] %s2604
          %2610 = dma.vmem_to_hbm [thread:$0]  %s2605, 256, %s15, [#allocation6], 128, 128, 8
        $region116: #{tpu_custom_call.1} parent=75 // pred_fallthru
          _
        // Predicated region
        $region117: #{tpu_custom_call.1} parent=75 // pred_check
          %p2611 = pneg %p406
        $region118: #{tpu_custom_call.1} parent=75 // pred_check_branch
          %2613 = sbr.rel (%p2611) target = $region120
        $region119: #{tpu_custom_call.1} parent=75 // pred_region
          %2614 = dma.done [#allocation6], 256
        $region120: #{tpu_custom_call.1} parent=75 // pred_fallthru
          _
      $region76: #{tpu_custom_call.1} parent=5 // pred_fallthru
        _
      %p2615 = scmp.le.s32.totalorder 2, %s34
      // Predicated region
      $region121: #{tpu_custom_call.1} parent=5 // pred_check
        %p2616 = pneg %p2615
      $region122: #{tpu_custom_call.1} parent=5 // pred_check_branch
        %2618 = sbr.rel (%p2616) target = $region124
      $region123: #{tpu_custom_call.1} parent=5 // pred_region
        %s2619 = ssub.s32 %s34, 2
      $region124: #{tpu_custom_call.1} parent=5 // pred_fallthru
        _
    $region6: #{tpu_custom_call.1} parent=1 // loop_footer
      %s38 = sadd.s32 1, %s34
    $region7: #{tpu_custom_call.1} parent=1 // loop_footer_branch
      %33 = sbr.rel target = $region3
    $region8: #{tpu_custom_call.1} parent=1 // loop_exit
      _
    %2620 = vsyncpa [#allocation5], 1
    %s2621 = scalar_lea.sflag [#allocation5], 1
    %2622 = vsyncpa %s2621, 1
    %2623 = vsyncpa [#allocation8], 1
    %s2624 = scalar_lea.sflag [#allocation8], 1
    %2625 = vsyncpa %s2624, 1
    %2626 = vsyncpa [#allocation11], 1
    %s2627 = scalar_lea.sflag [#allocation11], 1
    %2628 = vsyncpa %s2627, 1
    %2629 = vsyncpa [#allocation14], 1
    %s2630 = scalar_lea.sflag [#allocation14], 1
    %2631 = vsyncpa %s2630, 1
    %2632 = vsyncpa [#allocation6], 1
    %s2633 = scalar_lea.sflag [#allocation6], 1
    %2634 = vsyncpa %s2633, 1
  %2635 = vsyncmov [#allocation3]
  %s2636 = vpop.sfrf %2635
  %p2637 = scmp.eq.s32.totalorder %s2636, 0
  %p2638 = pneg %p2637
  %2640 = shalt.err (%p2638)

</llo_original>
